<compile_context>
chip_gen: v6e
topology: v6e:2x2x1
jax: 0.10.0
libtpu: 0.0.40
codegen_flags: <defaults>
</compile_context>

<pallas_src>
import jax
import jax.numpy as jnp
from jax.experimental import pallas as pl
from jax.experimental.pallas import tpu as pltpu

INFINITY_NUMBER = 1e12  # parity with the PyTorch module


def basic_attention_kernel(target_ref, x_ref, ctx_ref, nmask_ref,
                           w_c_ref, b_c_ref, w_v_ref, w_out_a_ref, w_out_b_ref,
                           h_ref, wc_ref, attn_ref):
    tb, S, D = ctx_ref.shape
    ctx = ctx_ref[...]                                      # (TB, S, D), mxu dtype

    # source = linear_c(context): the dominant (TB*S, D) @ (D, D) MXU matmul.
    src2 = jnp.dot(ctx.reshape(tb * S, D), w_c_ref[...],
                   preferred_element_type=jnp.float32) + b_c_ref[...]
    src = src2.reshape(tb, S, D)                            # (TB, S, D), f32

    # attn = tanh(target + source); target precomputed in the wrapper (tiny matmul).
    a = jnp.tanh(src + target_ref[...][:, None, :])         # (TB, S, D), f32

    # logits = linear_v(attn): VPU multiply + XLU lane reduce
    # (deliberately NOT an N=1 MXU matmul -- that would waste the systolic array).
    logits = jnp.sum(a * w_v_ref[...][None, :, :], axis=2)  # (TB, S), f32
    logits = logits + nmask_ref[...]                        # additive mask (0 / -INF)

    # Stabilized softmax over the source axis; divide goes to the EUP slot.
    m = jnp.max(logits, axis=1, keepdims=True)
    e = jnp.exp(logits - m)
    p = e * pl.reciprocal(jnp.sum(e, axis=1, keepdims=True), approx=True)
    attn_ref[...] = p

    # weighted_context = sum_s p * ctx (VPU broadcast+reduce; fine at small/medium S).
    # TODO(synk): for S in the hundreds, recast as a per-batch (1,S)@(S,D) MXU
    # contraction to drop the (TB,S,D) f32 intermediate (matters on v7x's 64 MiB VMEM).
    weighted = jnp.sum(p[:, :, None] * ctx, axis=1)         # (TB, D), f32
    wc_ref[...] = weighted.astype(wc_ref.dtype)

    # h_tilde = tanh(cat(weighted, input) @ W_out^T) == weighted @ W_a + input @ W_b.
    h = jnp.dot(weighted.astype(w_out_a_ref.dtype), w_out_a_ref[...],
                preferred_element_type=jnp.float32)
    h = h + jnp.dot(x_ref[...].astype(w_out_b_ref.dtype), w_out_b_ref[...],
                    preferred_element_type=jnp.float32)
    h_ref[...] = jnp.tanh(h)


def basic_attention(x, ctx, params, mask=None, *, block_b=8,
                    mxu_dtype=jnp.float32):
    """x: (B, D), ctx: (B, S, D); params follow nn.Linear (out, in) convention.

    mask: optional bool (B, S); True entries are masked out (as masked_fill -INF).
    mxu_dtype: operand dtype for the MXU matmuls (bf16 recommended on v6e/v7x).
    """
    B, S, D = ctx.shape
    tb = min(block_b, B)
    if B % tb != 0:
        tb = B  # TODO(synk): handle ragged batch tiles via masked edge blocks.

    w_in, w_c, b_c, w_v, w_out = (params["w_in"], params["w_c"], params["b_c"],
                                  params["w_v"], params["w_out"])

    x_f32 = x.astype(jnp.float32)
    # target = linear_in(input): tiny (B, D) @ (D, D); hoisted out of the kernel.
    target = jnp.dot(x_f32, w_in.T.astype(jnp.float32))

    ctx_in = ctx.astype(mxu_dtype)
    w_c_t = w_c.T.astype(mxu_dtype)                 # (D, D)
    b_c_2d = b_c.reshape(1, D).astype(jnp.float32)  # (1, D)
    w_v_row = w_v.reshape(1, D).astype(jnp.float32) # (1, D)
    w_out_t = w_out.T                               # (2D, D), split -> no in-kernel concat
    w_out_a = w_out_t[:D].astype(mxu_dtype)         # acts on weighted_context
    w_out_b = w_out_t[D:].astype(mxu_dtype)         # acts on input

    if mask is None:
        nmask = jnp.zeros((B, S), jnp.float32)
    else:
        nmask = jnp.where(mask, -INFINITY_NUMBER, 0.0).astype(jnp.float32)

    grid = (B // tb,)

    in_specs = [
        pl.BlockSpec((tb, D), lambda i: (i, 0)),        # target
        pl.BlockSpec((tb, D), lambda i: (i, 0)),        # x
        pl.BlockSpec((tb, S, D), lambda i: (i, 0, 0)),  # ctx (streamed per tile)
        pl.BlockSpec((tb, S), lambda i: (i, 0)),        # additive mask
        pl.BlockSpec((D, D), lambda i: (0, 0)),         # w_c   (resident)
        pl.BlockSpec((1, D), lambda i: (0, 0)),         # b_c   (resident)
        pl.BlockSpec((1, D), lambda i: (0, 0)),         # w_v   (resident)
        pl.BlockSpec((D, D), lambda i: (0, 0)),         # w_out_a (resident)
        pl.BlockSpec((D, D), lambda i: (0, 0)),         # w_out_b (resident)
    ]
    # NOTE: attn's last dim is S; for lane-dense stores keep S a multiple of 128
    # (or pack problems) in production shapes.
    out_specs = (
        pl.BlockSpec((tb, D), lambda i: (i, 0)),        # h_tilde
        pl.BlockSpec((tb, D), lambda i: (i, 0)),        # weighted_context
        pl.BlockSpec((tb, S), lambda i: (i, 0)),        # attn
    )
    out_shapes = (
        jax.ShapeDtypeStruct((B, D), jnp.float32),
        jax.ShapeDtypeStruct((B, D), jnp.float32),
        jax.ShapeDtypeStruct((B, S), jnp.float32),
    )

    itemsize = jnp.dtype(mxu_dtype).itemsize
    # VMEM budget: double-buffered ctx tile + resident weights + f32 intermediates.
    vmem_bytes = (2 * tb * S * D * itemsize
                  + 3 * D * D * itemsize
                  + 3 * tb * S * D * 4
                  + 8 * tb * D * 4 + 4 * tb * S * 4
                  + (2 << 20))
    vmem_bytes = int(min(max(vmem_bytes, 4 << 20), 64 << 20))

    cost = pl.CostEstimate(
        flops=2 * B * S * D * D + 4 * B * S * D + 4 * B * D * D,
        transcendentals=B * S * D + B * S + B * D,
        bytes_accessed=(B * S * D * itemsize + 3 * D * D * itemsize
                        + (2 * B * D + B * S + 2 * D) * 4
                        + (2 * B * D + B * S) * 4),
    )

    return pl.pallas_call(
        basic_attention_kernel,
        out_shape=out_shapes,
        grid=grid,
        in_specs=in_specs,
        out_specs=out_specs,
        compiler_params=pltpu.CompilerParams(
            dimension_semantics=("parallel",),
            vmem_limit_bytes=vmem_bytes),
        cost_estimate=cost,
    )(target, x_f32, ctx_in, nmask, w_c_t, b_c_2d, w_v_row, w_out_a, w_out_b)


def reference(x, ctx, params, mask=None):
    """Pure-JAX replica of the PyTorch forward (attn_only=False)."""
    w_in, w_c, b_c, w_v, w_out = (params["w_in"], params["w_c"], params["b_c"],
                                  params["w_v"], params["w_out"])
    target = x @ w_in.T
    src = ctx @ w_c.T + b_c
    a = jnp.tanh(target[:, None, :] + src)
    logits = (a @ w_v.T)[..., 0]
    if mask is not None:
        logits = jnp.where(mask, -INFINITY_NUMBER, logits)
    p = jax.nn.softmax(logits, axis=1)
    wc = jnp.einsum("bs,bsd->bd", p, ctx)
    h = jnp.tanh(jnp.concatenate([wc, x], axis=1) @ w_out.T)
    return h, wc, p


def init_params(key, dim):
    """Deterministic init; shapes follow nn.Linear conventions (out, in)."""
    k1, k2, k3, k4, k5 = jax.random.split(key, 5)
    scale = 1.0 / jnp.sqrt(dim)
    return {
        "w_in": jax.random.uniform(k1, (dim, dim), jnp.float32, -scale, scale),
        "w_c": jax.random.uniform(k2, (dim, dim), jnp.float32, -scale, scale),
        "b_c": jax.random.uniform(k3, (dim,), jnp.float32, -scale, scale),
        "w_v": jax.random.uniform(k4, (1, dim), jnp.float32, -scale, scale),
        "w_out": jax.random.uniform(k5, (dim, 2 * dim), jnp.float32,
                                    -1.0 / jnp.sqrt(2.0 * dim),
                                    1.0 / jnp.sqrt(2.0 * dim)),
    }


if __name__ == "__main__":
    # Lane-dense D (multiple of 128), sublane-aligned batch tiles (TB=8, grid=(2,)).
    B, S, D = 16, 8, 128
    key = jax.random.PRNGKey(0)
    kx, kc, km, kp = jax.random.split(key, 4)

    x = jax.random.normal(kx, (B, D), dtype=jnp.float32)
    ctx = jax.random.normal(kc, (B, S, D), dtype=jnp.float32)
    params = init_params(kp, D)

    # --- f32 MXU path, mask=None (tight-ish tolerance; approx reciprocal only diff) ---
    h, wc, attn = basic_attention(x, ctx, params)
    jax.block_until_ready((h, wc, attn))
    h_r, wc_r, attn_r = reference(x, ctx, params)
    assert jnp.allclose(h, h_r, rtol=2e-3, atol=2e-3)
    assert jnp.allclose(wc, wc_r, rtol=2e-3, atol=2e-3)
    assert jnp.allclose(attn, attn_r, rtol=2e-3, atol=2e-3)

    # --- masked path (exercises the masked_fill(-INF) branch) ---
    lengths = jax.random.randint(km, (B,), 3, S + 1)
    mask = jnp.arange(S)[None, :] >= lengths[:, None]   # True = masked out
    h_m, wc_m, attn_m = basic_attention(x, ctx, params, mask=mask)
    jax.block_until_ready((h_m, wc_m, attn_m))
    h_mr, wc_mr, attn_mr = reference(x, ctx, params, mask=mask)
    assert jnp.allclose(attn_m, attn_mr, rtol=2e-3, atol=2e-3)
    assert jnp.allclose(h_m, h_mr, rtol=2e-3, atol=2e-3)
    assert jnp.allclose(wc_m, wc_mr, rtol=2e-3, atol=2e-3)

    # --- bf16 MXU-operand path (recommended on v6e/v7x), f32 accumulate ---
    h_b, wc_b, attn_b = basic_attention(x, ctx, params, mxu_dtype=jnp.bfloat16)
    jax.block_until_ready((h_b, wc_b, attn_b))
    assert jnp.allclose(h_b, h_r, rtol=5e-2, atol=5e-2)
    assert jnp.allclose(wc_b, wc_r, rtol=5e-2, atol=5e-2)
    assert jnp.allclose(attn_b, attn_r, rtol=5e-2, atol=5e-2)

    assert h.shape == (B, D) and wc.shape == (B, D) and attn.shape == (B, S)
    print("KERNEL_OK")
</pallas_src>

<mosaic_0001>
module attributes {stable_mosaic.version = 11 : i64} {
  func.func @basic_attention_kernel(%arg0: i32, %arg1: memref<8x128xf32, #tpu.memory_space<vmem>>, %arg2: memref<8x128xf32, #tpu.memory_space<vmem>>, %arg3: memref<8x8x128xf32, #tpu.memory_space<vmem>>, %arg4: memref<8x8xf32, #tpu.memory_space<vmem>>, %arg5: memref<128x128xf32, #tpu.memory_space<vmem>>, %arg6: memref<1x128xf32, #tpu.memory_space<vmem>>, %arg7: memref<1x128xf32, #tpu.memory_space<vmem>>, %arg8: memref<128x128xf32, #tpu.memory_space<vmem>>, %arg9: memref<128x128xf32, #tpu.memory_space<vmem>>, %arg10: memref<8x128xf32, #tpu.memory_space<vmem>>, %arg11: memref<8x128xf32, #tpu.memory_space<vmem>>, %arg12: memref<8x8xf32, #tpu.memory_space<vmem>>) attributes {dimension_semantics = [#tpu.dimension_semantics<parallel>], iteration_bounds = array<i64: 2>, scalar_prefetch = 0 : i64, scratch_operands = 0 : i64, tpu.core_type = #tpu.core_type<tc>, window_params = [{transform_indices = @transform_0, window_bounds = array<i64: 8, 128>}, {transform_indices = @transform_1, window_bounds = array<i64: 8, 128>}, {transform_indices = @transform_2, window_bounds = array<i64: 8, 8, 128>}, {transform_indices = @transform_3, window_bounds = array<i64: 8, 8>}, {pipeline_mode = #tpu.pipeline_mode<synchronous>, transform_indices = @transform_4, window_bounds = array<i64: 128, 128>}, {pipeline_mode = #tpu.pipeline_mode<synchronous>, transform_indices = @transform_5, window_bounds = array<i64: 1, 128>}, {pipeline_mode = #tpu.pipeline_mode<synchronous>, transform_indices = @transform_6, window_bounds = array<i64: 1, 128>}, {pipeline_mode = #tpu.pipeline_mode<synchronous>, transform_indices = @transform_7, window_bounds = array<i64: 128, 128>}, {pipeline_mode = #tpu.pipeline_mode<synchronous>, transform_indices = @transform_8, window_bounds = array<i64: 128, 128>}, {transform_indices = @transform_9, window_bounds = array<i64: 8, 128>}, {transform_indices = @transform_10, window_bounds = array<i64: 8, 128>}, {transform_indices = @transform_11, window_bounds = array<i64: 8, 8>}]} {
    %c0 = arith.constant 0 : index
    %c0_0 = arith.constant 0 : index
    %c0_1 = arith.constant 0 : index
    %0 = vector.load %arg3[%c0, %c0_0, %c0_1] : memref<8x8x128xf32, #tpu.memory_space<vmem>>, vector<8x8x128xf32>
    %1 = vector.shape_cast %0 : vector<8x8x128xf32> to vector<64x128xf32>
    %c0_2 = arith.constant 0 : index
    %c0_3 = arith.constant 0 : index
    %2 = vector.load %arg5[%c0_2, %c0_3] : memref<128x128xf32, #tpu.memory_space<vmem>>, vector<128x128xf32>
    %cst = arith.constant dense<0.000000e+00> : vector<64x128xf32>
    %3 = tpu.matmul %1, %2, %cst {dimension_numbers = #tpu.dot_dimension_numbers<[1], [0], [0], [1], [0, 0, 1, 1], [], []>} : vector<64x128xf32>, vector<128x128xf32>, vector<64x128xf32> -> vector<64x128xf32>
    %c0_4 = arith.constant 0 : index
    %c0_5 = arith.constant 0 : index
    %4 = vector.load %arg6[%c0_4, %c0_5] : memref<1x128xf32, #tpu.memory_space<vmem>>, vector<1x128xf32>
    %5 = vector.broadcast %4 : vector<1x128xf32> to vector<64x128xf32>
    %6 = arith.addf %3, %5 : vector<64x128xf32>
    %7 = vector.shape_cast %6 : vector<64x128xf32> to vector<8x8x128xf32>
    %c0_6 = arith.constant 0 : index
    %c0_7 = arith.constant 0 : index
    %8 = vector.load %arg1[%c0_6, %c0_7] : memref<8x128xf32, #tpu.memory_space<vmem>>, vector<8x128xf32>
    %9 = vector.shape_cast %8 : vector<8x128xf32> to vector<8x1x128xf32>
    %10 = vector.broadcast %9 : vector<8x1x128xf32> to vector<8x8x128xf32>
    %11 = arith.addf %7, %10 : vector<8x8x128xf32>
    %12 = math.tanh %11 : vector<8x8x128xf32>
    %c0_8 = arith.constant 0 : index
    %c0_9 = arith.constant 0 : index
    %13 = vector.load %arg7[%c0_8, %c0_9] : memref<1x128xf32, #tpu.memory_space<vmem>>, vector<1x128xf32>
    %14 = vector.shape_cast %13 : vector<1x128xf32> to vector<1x1x128xf32>
    %15 = vector.broadcast %14 : vector<1x1x128xf32> to vector<8x8x128xf32>
    %16 = arith.mulf %12, %15 : vector<8x8x128xf32>
    %cst_10 = arith.constant dense<0.000000e+00> : vector<8x8xf32>
    %17 = vector.multi_reduction <add>, %16, %cst_10 [2] : vector<8x8x128xf32> to vector<8x8xf32>
    %c0_11 = arith.constant 0 : index
    %c0_12 = arith.constant 0 : index
    %18 = vector.load %arg4[%c0_11, %c0_12] : memref<8x8xf32, #tpu.memory_space<vmem>>, vector<8x8xf32>
    %19 = arith.addf %17, %18 : vector<8x8xf32>
    %cst_13 = arith.constant dense<0xFF800000> : vector<8xf32>
    %20 = vector.multi_reduction <maximumf>, %19, %cst_13 [1] : vector<8x8xf32> to vector<8xf32>
    %21 = vector.shape_cast %20 : vector<8xf32> to vector<8x1xf32>
    %22 = vector.broadcast %21 : vector<8x1xf32> to vector<8x8xf32>
    %23 = arith.subf %19, %22 : vector<8x8xf32>
    %24 = math.exp %23 : vector<8x8xf32>
    %cst_14 = arith.constant dense<0.000000e+00> : vector<8xf32>
    %25 = vector.multi_reduction <add>, %24, %cst_14 [1] : vector<8x8xf32> to vector<8xf32>
    %26 = vector.shape_cast %25 : vector<8xf32> to vector<8x1xf32>
    %27 = tpu.reciprocal %26 {approx = true} : vector<8x1xf32> -> vector<8x1xf32>
    %28 = vector.broadcast %27 : vector<8x1xf32> to vector<8x8xf32>
    %29 = arith.mulf %24, %28 : vector<8x8xf32>
    %c0_15 = arith.constant 0 : index
    %c0_16 = arith.constant 0 : index
    %30 = vector.load %arg12[%c0_15, %c0_16] : memref<8x8xf32, #tpu.memory_space<vmem>>, vector<8x8xf32>
    tpu.vector_store %arg12[%c0_15, %c0_16], %29 {strides = array<i32>} : memref<8x8xf32, #tpu.memory_space<vmem>>, vector<8x8xf32>,
    %31 = vector.shape_cast %29 : vector<8x8xf32> to vector<8x8x1xf32>
    %32 = vector.broadcast %31 : vector<8x8x1xf32> to vector<8x8x128xf32>
    %33 = arith.mulf %32, %0 : vector<8x8x128xf32>
    %cst_17 = arith.constant dense<0.000000e+00> : vector<8x128xf32>
    %34 = vector.multi_reduction <add>, %33, %cst_17 [1] : vector<8x8x128xf32> to vector<8x128xf32>
    %c0_18 = arith.constant 0 : index
    %c0_19 = arith.constant 0 : index
    %35 = vector.load %arg11[%c0_18, %c0_19] : memref<8x128xf32, #tpu.memory_space<vmem>>, vector<8x128xf32>
    tpu.vector_store %arg11[%c0_18, %c0_19], %34 {strides = array<i32>} : memref<8x128xf32, #tpu.memory_space<vmem>>, vector<8x128xf32>,
    %c0_20 = arith.constant 0 : index
    %c0_21 = arith.constant 0 : index
    %36 = vector.load %arg8[%c0_20, %c0_21] : memref<128x128xf32, #tpu.memory_space<vmem>>, vector<128x128xf32>
    %cst_22 = arith.constant dense<0.000000e+00> : vector<8x128xf32>
    %37 = tpu.matmul %34, %36, %cst_22 {dimension_numbers = #tpu.dot_dimension_numbers<[1], [0], [0], [1], [0, 0, 1, 1], [], []>} : vector<8x128xf32>, vector<128x128xf32>, vector<8x128xf32> -> vector<8x128xf32>
    %c0_23 = arith.constant 0 : index
    %c0_24 = arith.constant 0 : index
    %38 = vector.load %arg2[%c0_23, %c0_24] : memref<8x128xf32, #tpu.memory_space<vmem>>, vector<8x128xf32>
    %c0_25 = arith.constant 0 : index
    %c0_26 = arith.constant 0 : index
    %39 = vector.load %arg9[%c0_25, %c0_26] : memref<128x128xf32, #tpu.memory_space<vmem>>, vector<128x128xf32>
    %cst_27 = arith.constant dense<0.000000e+00> : vector<8x128xf32>
    %40 = tpu.matmul %38, %39, %cst_27 {dimension_numbers = #tpu.dot_dimension_numbers<[1], [0], [0], [1], [0, 0, 1, 1], [], []>} : vector<8x128xf32>, vector<128x128xf32>, vector<8x128xf32> -> vector<8x128xf32>
    %41 = arith.addf %37, %40 : vector<8x128xf32>
    %42 = math.tanh %41 : vector<8x128xf32>
    %c0_28 = arith.constant 0 : index
    %c0_29 = arith.constant 0 : index
    %43 = vector.load %arg10[%c0_28, %c0_29] : memref<8x128xf32, #tpu.memory_space<vmem>>, vector<8x128xf32>
    tpu.vector_store %arg10[%c0_28, %c0_29], %42 {strides = array<i32>} : memref<8x128xf32, #tpu.memory_space<vmem>>, vector<8x128xf32>,
    return
  }
  func.func @transform_0(%arg0: i32) -> (i32, i32) {
    %c0_i32 = arith.constant 0 : i32
    %c0_i32_0 = arith.constant 0 : i32
    return %arg0, %c0_i32 : i32, i32
  }
  func.func @transform_1(%arg0: i32) -> (i32, i32) {
    %c0_i32 = arith.constant 0 : i32
    %c0_i32_0 = arith.constant 0 : i32
    return %arg0, %c0_i32 : i32, i32
  }
  func.func @transform_2(%arg0: i32) -> (i32, i32, i32) {
    %c0_i32 = arith.constant 0 : i32
    %c0_i32_0 = arith.constant 0 : i32
    %c0_i32_1 = arith.constant 0 : i32
    return %arg0, %c0_i32, %c0_i32_0 : i32, i32, i32
  }
  func.func @transform_3(%arg0: i32) -> (i32, i32) {
    %c0_i32 = arith.constant 0 : i32
    %c0_i32_0 = arith.constant 0 : i32
    return %arg0, %c0_i32 : i32, i32
  }
  func.func @transform_4(%arg0: i32) -> (i32, i32) {
    %c0_i32 = arith.constant 0 : i32
    %c0_i32_0 = arith.constant 0 : i32
    %c0_i32_1 = arith.constant 0 : i32
    return %c0_i32, %c0_i32_0 : i32, i32
  }
  func.func @transform_5(%arg0: i32) -> (i32, i32) {
    %c0_i32 = arith.constant 0 : i32
    %c0_i32_0 = arith.constant 0 : i32
    %c0_i32_1 = arith.constant 0 : i32
    return %c0_i32, %c0_i32_0 : i32, i32
  }
  func.func @transform_6(%arg0: i32) -> (i32, i32) {
    %c0_i32 = arith.constant 0 : i32
    %c0_i32_0 = arith.constant 0 : i32
    %c0_i32_1 = arith.constant 0 : i32
    return %c0_i32, %c0_i32_0 : i32, i32
  }
  func.func @transform_7(%arg0: i32) -> (i32, i32) {
    %c0_i32 = arith.constant 0 : i32
    %c0_i32_0 = arith.constant 0 : i32
    %c0_i32_1 = arith.constant 0 : i32
    return %c0_i32, %c0_i32_0 : i32, i32
  }
  func.func @transform_8(%arg0: i32) -> (i32, i32) {
    %c0_i32 = arith.constant 0 : i32
    %c0_i32_0 = arith.constant 0 : i32
    %c0_i32_1 = arith.constant 0 : i32
    return %c0_i32, %c0_i32_0 : i32, i32
  }
  func.func @transform_9(%arg0: i32) -> (i32, i32) {
    %c0_i32 = arith.constant 0 : i32
    %c0_i32_0 = arith.constant 0 : i32
    return %arg0, %c0_i32 : i32, i32
  }
  func.func @transform_10(%arg0: i32) -> (i32, i32) {
    %c0_i32 = arith.constant 0 : i32
    %c0_i32_0 = arith.constant 0 : i32
    return %arg0, %c0_i32 : i32, i32
  }
  func.func @transform_11(%arg0: i32) -> (i32, i32) {
    %c0_i32 = arith.constant 0 : i32
    %c0_i32_0 = arith.constant 0 : i32
    return %arg0, %c0_i32 : i32, i32
  }
}

</mosaic_0001>

<llo_original>
// kernel: tpu_custom_call.1
$region0: #{tpu_custom_call.1}
  #allocation0 [shape = 'u32[]', space=smem, size = 0x4, offset = 0x4, fixed_abs, tag = 'smem constant byte address 0x4 - core index']
  #allocation1 [shape = 'u32[144,128]{1,0:T(1,128)}', space=vmem, size = 0x12000, scoped, tag = 'internal scratch']
  %s0 = inlined_call_operand.vmem [shape: f32[16,128], index: 0, kind: input, shape index: {}]
  %s1 = inlined_call_operand.hbm [shape: f32[16,128], index: 1, kind: input, shape index: {}]
  %s2 = inlined_call_operand.hbm [shape: f32[16,8,128], index: 2, kind: input, shape index: {}]
  %s3 = inlined_call_operand.vmem [shape: f32[16,8], index: 3, kind: input, shape index: {}]
  %s4 = inlined_call_operand.hbm [shape: f32[128,128], index: 4, kind: input, shape index: {}]
  %s5 = inlined_call_operand.vmem [shape: f32[1,128], index: 5, kind: input, shape index: {}]
  %s6 = inlined_call_operand.vmem [shape: f32[1,128], index: 6, kind: input, shape index: {}]
  %s7 = inlined_call_operand.hbm [shape: f32[128,128], index: 7, kind: input, shape index: {}]
  %s8 = inlined_call_operand.hbm [shape: f32[128,128], index: 8, kind: input, shape index: {}]
  %s9 = inlined_call_operand.hbm [shape: f32[16,128], index: 9, kind: output, shape index: {0}]
  %s10 = inlined_call_operand.hbm [shape: f32[16,128], index: 10, kind: output, shape index: {1}]
  %s11 = inlined_call_operand.vmem [shape: f32[16,8], index: 11, kind: output, shape index: {2}]
  %12 = xla_tuple %s9, %s10, %s11
  %s13 = sld [smem:[#allocation0]]
  $region105: #{tpu_custom_call.1} parent=0
    _
  %s15 = ssub.s32 1, %s13
  %s16 = scalar_select 0, %s15, %s13
  $region1: #{tpu_custom_call.1} parent=0
    #allocation2 [shape = 'u8[8192]{0}', space=vmem, size = 0x2000, scoped, tag = 'input window, operand 1']
    #allocation3 [shape = 's32[2]{0}', space=sflag, size = 0x8, scoped, tag = 'scoped memory for tpu_custom_call.1']
    #allocation4 [shape = 's32[2]{0}', space=sflag, size = 0x8, scoped, tag = 'scoped memory for tpu_custom_call.1']
    #allocation5 [shape = 'u8[65536]{0}', space=vmem, size = 0x10000, scoped, tag = 'input window, operand 2']
    #allocation6 [shape = 's32[2]{0}', space=sflag, size = 0x8, scoped, tag = 'scoped memory for tpu_custom_call.1']
    #allocation7 [shape = 'u8[65536]{0}', space=vmem, size = 0x10000, scoped, tag = 'input window, operand 4, single buffered']
    #allocation8 [shape = 'u8[65536]{0}', space=vmem, size = 0x10000, scoped, tag = 'input window, operand 7, single buffered']
    #allocation9 [shape = 's32[1]{0}', space=sflag, size = 0x4, scoped, tag = 'scoped memory for tpu_custom_call.1']
    #allocation10 [shape = 'u8[65536]{0}', space=vmem, size = 0x10000, scoped, tag = 'input window, operand 8, single buffered']
    #allocation11 [shape = 'u8[8192]{0}', space=vmem, size = 0x2000, scoped, tag = 'output window, operand 0']
    #allocation12 [shape = 'u8[8192]{0}', space=vmem, size = 0x2000, scoped, tag = 'output window, operand 1']
    #allocation13 [shape = 's32[2]{0}', space=sflag, size = 0x8, scoped, tag = 'scoped memory for tpu_custom_call.1']
    %17 = vsyncpa [#allocation3], 0
    %s18 = scalar_lea.sflag [#allocation3], 1
    %19 = vsyncpa %s18, 0
    %20 = vsyncpa [#allocation6], 0
    %s21 = scalar_lea.sflag [#allocation6], 1
    %22 = vsyncpa %s21, 0
    %23 = vsyncpa [#allocation9], 0
    %24 = vsyncpa [#allocation4], 0
    %s25 = scalar_lea.sflag [#allocation4], 1
    %26 = vsyncpa %s25, 0
    %27 = vsyncpa [#allocation13], 0
    %s28 = scalar_lea.sflag [#allocation13], 1
    %29 = vsyncpa %s28, 0
    loop: start=0, step=1, limit=4
    $region2: #{tpu_custom_call.1} parent=1 // loop_pre_header
      _
    $region3: #{tpu_custom_call.1} parent=1 // loop_header
      %s31 = sphi 0, %s35
      %p32 = scmp.ge.s32.totalorder %s31, 4
      %s41 = sphi 0, %s43
      %s44 = sphi 0, %s41
      %s45 = sphi 0, %s44
      %s61 = sphi 0, %s45
      %s67 = sphi 0, %s69
      %s70 = sphi 0, %s67
      %s71 = sphi 0, %s70
      %s87 = sphi 0, %s71
      %s93 = sphi 0, %s95
      %s96 = sphi 0, %s93
      %s97 = sphi 0, %s96
      %s113 = sphi 0, %s97
      %s119 = sphi 0, %s121
      %s122 = sphi 0, %s119
      %s123 = sphi 0, %s122
      %s139 = sphi 0, %s123
      %s143 = sphi 0, %s143
      %s145 = sphi 0, %s143
      %s146 = sphi 0, %s145
      %s160 = sphi 0, %s146
      %s164 = sphi 0, %s164
      %s166 = sphi 0, %s164
      %s167 = sphi 0, %s166
      %s181 = sphi 0, %s167
      %s185 = sphi 0, %s185
      %s187 = sphi 0, %s185
      %s188 = sphi 0, %s187
      %s202 = sphi 0, %s188
      %s206 = sphi 0, %s206
      %s208 = sphi 0, %s206
      %s209 = sphi 0, %s208
      %s223 = sphi 0, %s209
      %s227 = sphi 0, %s227
      %s229 = sphi 0, %s227
      %s230 = sphi 0, %s229
      %s244 = sphi 0, %s230
      %s250 = sphi 0, %s252
      %s253 = sphi 0, %s250
      %s254 = sphi 0, %s253
      %s270 = sphi 0, %s254
      %s276 = sphi 0, %s278
      %s279 = sphi 0, %s276
      %s280 = sphi 0, %s279
      %s296 = sphi 0, %s280
      %s302 = sphi 0, %s304
      %s305 = sphi 0, %s302
      %s306 = sphi 0, %s305
      %s322 = sphi 0, %s306
    $region4: #{tpu_custom_call.1} parent=1 // loop_header_branch
      %34 = sbr.rel (%p32) target = $region8
    $region5: #{tpu_custom_call.1} parent=1 // loop_body
      %s36 = ssub.s32 %s31, 1
      %s37 = ssub.s32 %s31, 2
      %s38 = sadd.s32 %s31, 1
      %s39 = ssub.s32 %s31, %s38
      %p40 = scmp.eq.s32.totalorder %s39, 0
      %s42 = sadd.s32 %s41, 1
      %s43 = scalar_select %p40, %s41, %s42
      %p46 = pneg %p40
      %p47 = scmp.eq.s32.totalorder %s31, 1
      %p48 = por %p46, %p47
      %p49 = scmp.ne.s32.totalorder %s41, %s44
      %p50 = scmp.eq.s32.totalorder %s31, 0
      %p51 = por %p49, %p50
      %p52 = scmp.ne.s32.totalorder %s41, %s44
      %p53 = scmp.eq.s32.totalorder %s36, 1
      %p54 = por %p52, %p53
      %p55 = scmp.ne.s32.totalorder %s44, %s45
      %p56 = scmp.eq.s32.totalorder %s36, 0
      %p57 = por %p55, %p56
      %p58 = scmp.ne.s32.totalorder %s44, %s45
      %p59 = scmp.eq.s32.totalorder %s37, 1
      %p60 = por %p58, %p59
      %p62 = scmp.ne.s32.totalorder %s45, %s61
      %p63 = scmp.eq.s32.totalorder %s37, 0
      %p64 = por %p62, %p63
      %s65 = ssub.s32 %s31, %s38
      %p66 = scmp.eq.s32.totalorder %s65, 0
      %s68 = sadd.s32 %s67, 1
      %s69 = scalar_select %p66, %s67, %s68
      %p72 = pneg %p66
      %p73 = scmp.eq.s32.totalorder %s31, 1
      %p74 = por %p72, %p73
      %p75 = scmp.ne.s32.totalorder %s67, %s70
      %p76 = scmp.eq.s32.totalorder %s31, 0
      %p77 = por %p75, %p76
      %p78 = scmp.ne.s32.totalorder %s67, %s70
      %p79 = scmp.eq.s32.totalorder %s36, 1
      %p80 = por %p78, %p79
      %p81 = scmp.ne.s32.totalorder %s70, %s71
      %p82 = scmp.eq.s32.totalorder %s36, 0
      %p83 = por %p81, %p82
      %p84 = scmp.ne.s32.totalorder %s70, %s71
      %p85 = scmp.eq.s32.totalorder %s37, 1
      %p86 = por %p84, %p85
      %p88 = scmp.ne.s32.totalorder %s71, %s87
      %p89 = scmp.eq.s32.totalorder %s37, 0
      %p90 = por %p88, %p89
      %s91 = ssub.s32 %s31, %s38
      %p92 = scmp.eq.s32.totalorder %s91, 0
      %s94 = sadd.s32 %s93, 1
      %s95 = scalar_select %p92, %s93, %s94
      %p98 = pneg %p92
      %p99 = scmp.eq.s32.totalorder %s31, 1
      %p100 = por %p98, %p99
      %p101 = scmp.ne.s32.totalorder %s93, %s96
      %p102 = scmp.eq.s32.totalorder %s31, 0
      %p103 = por %p101, %p102
      %p104 = scmp.ne.s32.totalorder %s93, %s96
      %p105 = scmp.eq.s32.totalorder %s36, 1
      %p106 = por %p104, %p105
      %p107 = scmp.ne.s32.totalorder %s96, %s97
      %p108 = scmp.eq.s32.totalorder %s36, 0
      %p109 = por %p107, %p108
      %p110 = scmp.ne.s32.totalorder %s96, %s97
      %p111 = scmp.eq.s32.totalorder %s37, 1
      %p112 = por %p110, %p111
      %p114 = scmp.ne.s32.totalorder %s97, %s113
      %p115 = scmp.eq.s32.totalorder %s37, 0
      %p116 = por %p114, %p115
      %s117 = ssub.s32 %s31, %s38
      %p118 = scmp.eq.s32.totalorder %s117, 0
      %s120 = sadd.s32 %s119, 1
      %s121 = scalar_select %p118, %s119, %s120
      %p124 = pneg %p118
      %p125 = scmp.eq.s32.totalorder %s31, 1
      %p126 = por %p124, %p125
      %p127 = scmp.ne.s32.totalorder %s119, %s122
      %p128 = scmp.eq.s32.totalorder %s31, 0
      %p129 = por %p127, %p128
      %p130 = scmp.ne.s32.totalorder %s119, %s122
      %p131 = scmp.eq.s32.totalorder %s36, 1
      %p132 = por %p130, %p131
      %p133 = scmp.ne.s32.totalorder %s122, %s123
      %p134 = scmp.eq.s32.totalorder %s36, 0
      %p135 = por %p133, %p134
      %p136 = scmp.ne.s32.totalorder %s122, %s123
      %p137 = scmp.eq.s32.totalorder %s37, 1
      %p138 = por %p136, %p137
      %p140 = scmp.ne.s32.totalorder %s123, %s139
      %p141 = scmp.eq.s32.totalorder %s37, 0
      %p142 = por %p140, %p141
      %s144 = sadd.s32 %s143, 1
      %p147 = scmp.eq.s32.totalorder %s31, 1
      %p148 = scmp.ne.s32.totalorder %s143, %s145
      %p149 = scmp.eq.s32.totalorder %s31, 0
      %p150 = por %p148, %p149
      %p151 = scmp.ne.s32.totalorder %s143, %s145
      %p152 = scmp.eq.s32.totalorder %s36, 1
      %p153 = por %p151, %p152
      %p154 = scmp.ne.s32.totalorder %s145, %s146
      %p155 = scmp.eq.s32.totalorder %s36, 0
      %p156 = por %p154, %p155
      %p157 = scmp.ne.s32.totalorder %s145, %s146
      %p158 = scmp.eq.s32.totalorder %s37, 1
      %p159 = por %p157, %p158
      %p161 = scmp.ne.s32.totalorder %s146, %s160
      %p162 = scmp.eq.s32.totalorder %s37, 0
      %p163 = por %p161, %p162
      %s165 = sadd.s32 %s164, 1
      %p168 = scmp.eq.s32.totalorder %s31, 1
      %p169 = scmp.ne.s32.totalorder %s164, %s166
      %p170 = scmp.eq.s32.totalorder %s31, 0
      %p171 = por %p169, %p170
      %p172 = scmp.ne.s32.totalorder %s164, %s166
      %p173 = scmp.eq.s32.totalorder %s36, 1
      %p174 = por %p172, %p173
      %p175 = scmp.ne.s32.totalorder %s166, %s167
      %p176 = scmp.eq.s32.totalorder %s36, 0
      %p177 = por %p175, %p176
      %p178 = scmp.ne.s32.totalorder %s166, %s167
      %p179 = scmp.eq.s32.totalorder %s37, 1
      %p180 = por %p178, %p179
      %p182 = scmp.ne.s32.totalorder %s167, %s181
      %p183 = scmp.eq.s32.totalorder %s37, 0
      %p184 = por %p182, %p183
      %s186 = sadd.s32 %s185, 1
      %p189 = scmp.eq.s32.totalorder %s31, 1
      %p190 = scmp.ne.s32.totalorder %s185, %s187
      %p191 = scmp.eq.s32.totalorder %s31, 0
      %p192 = por %p190, %p191
      %p193 = scmp.ne.s32.totalorder %s185, %s187
      %p194 = scmp.eq.s32.totalorder %s36, 1
      %p195 = por %p193, %p194
      %p196 = scmp.ne.s32.totalorder %s187, %s188
      %p197 = scmp.eq.s32.totalorder %s36, 0
      %p198 = por %p196, %p197
      %p199 = scmp.ne.s32.totalorder %s187, %s188
      %p200 = scmp.eq.s32.totalorder %s37, 1
      %p201 = por %p199, %p200
      %p203 = scmp.ne.s32.totalorder %s188, %s202
      %p204 = scmp.eq.s32.totalorder %s37, 0
      %p205 = por %p203, %p204
      %s207 = sadd.s32 %s206, 1
      %p210 = scmp.eq.s32.totalorder %s31, 1
      %p211 = scmp.ne.s32.totalorder %s206, %s208
      %p212 = scmp.eq.s32.totalorder %s31, 0
      %p213 = por %p211, %p212
      %p214 = scmp.ne.s32.totalorder %s206, %s208
      %p215 = scmp.eq.s32.totalorder %s36, 1
      %p216 = por %p214, %p215
      %p217 = scmp.ne.s32.totalorder %s208, %s209
      %p218 = scmp.eq.s32.totalorder %s36, 0
      %p219 = por %p217, %p218
      %p220 = scmp.ne.s32.totalorder %s208, %s209
      %p221 = scmp.eq.s32.totalorder %s37, 1
      %p222 = por %p220, %p221
      %p224 = scmp.ne.s32.totalorder %s209, %s223
      %p225 = scmp.eq.s32.totalorder %s37, 0
      %p226 = por %p224, %p225
      %s228 = sadd.s32 %s227, 1
      %p231 = scmp.eq.s32.totalorder %s31, 1
      %p232 = scmp.ne.s32.totalorder %s227, %s229
      %p233 = scmp.eq.s32.totalorder %s31, 0
      %p234 = por %p232, %p233
      %p235 = scmp.ne.s32.totalorder %s227, %s229
      %p236 = scmp.eq.s32.totalorder %s36, 1
      %p237 = por %p235, %p236
      %p238 = scmp.ne.s32.totalorder %s229, %s230
      %p239 = scmp.eq.s32.totalorder %s36, 0
      %p240 = por %p238, %p239
      %p241 = scmp.ne.s32.totalorder %s229, %s230
      %p242 = scmp.eq.s32.totalorder %s37, 1
      %p243 = por %p241, %p242
      %p245 = scmp.ne.s32.totalorder %s230, %s244
      %p246 = scmp.eq.s32.totalorder %s37, 0
      %p247 = por %p245, %p246
      %s248 = ssub.s32 %s31, %s38
      %p249 = scmp.eq.s32.totalorder %s248, 0
      %s251 = sadd.s32 %s250, 1
      %s252 = scalar_select %p249, %s250, %s251
      %p255 = pneg %p249
      %p256 = scmp.eq.s32.totalorder %s31, 1
      %p257 = por %p255, %p256
      %p258 = scmp.ne.s32.totalorder %s250, %s253
      %p259 = scmp.eq.s32.totalorder %s31, 0
      %p260 = por %p258, %p259
      %p261 = scmp.ne.s32.totalorder %s250, %s253
      %p262 = scmp.eq.s32.totalorder %s36, 1
      %p263 = por %p261, %p262
      %p264 = scmp.ne.s32.totalorder %s253, %s254
      %p265 = scmp.eq.s32.totalorder %s36, 0
      %p266 = por %p264, %p265
      %p267 = scmp.ne.s32.totalorder %s253, %s254
      %p268 = scmp.eq.s32.totalorder %s37, 1
      %p269 = por %p267, %p268
      %p271 = scmp.ne.s32.totalorder %s254, %s270
      %p272 = scmp.eq.s32.totalorder %s37, 0
      %p273 = por %p271, %p272
      %s274 = ssub.s32 %s31, %s38
      %p275 = scmp.eq.s32.totalorder %s274, 0
      %s277 = sadd.s32 %s276, 1
      %s278 = scalar_select %p275, %s276, %s277
      %p281 = pneg %p275
      %p282 = scmp.eq.s32.totalorder %s31, 1
      %p283 = por %p281, %p282
      %p284 = scmp.ne.s32.totalorder %s276, %s279
      %p285 = scmp.eq.s32.totalorder %s31, 0
      %p286 = por %p284, %p285
      %p287 = scmp.ne.s32.totalorder %s276, %s279
      %p288 = scmp.eq.s32.totalorder %s36, 1
      %p289 = por %p287, %p288
      %p290 = scmp.ne.s32.totalorder %s279, %s280
      %p291 = scmp.eq.s32.totalorder %s36, 0
      %p292 = por %p290, %p291
      %p293 = scmp.ne.s32.totalorder %s279, %s280
      %p294 = scmp.eq.s32.totalorder %s37, 1
      %p295 = por %p293, %p294
      %p297 = scmp.ne.s32.totalorder %s280, %s296
      %p298 = scmp.eq.s32.totalorder %s37, 0
      %p299 = por %p297, %p298
      %s300 = ssub.s32 %s31, %s38
      %p301 = scmp.eq.s32.totalorder %s300, 0
      %s303 = sadd.s32 %s302, 1
      %s304 = scalar_select %p301, %s302, %s303
      %p307 = pneg %p301
      %p308 = scmp.eq.s32.totalorder %s31, 1
      %p309 = por %p307, %p308
      %p310 = scmp.ne.s32.totalorder %s302, %s305
      %p311 = scmp.eq.s32.totalorder %s31, 0
      %p312 = por %p310, %p311
      %p313 = scmp.ne.s32.totalorder %s302, %s305
      %p314 = scmp.eq.s32.totalorder %s36, 1
      %p315 = por %p313, %p314
      %p316 = scmp.ne.s32.totalorder %s305, %s306
      %p317 = scmp.eq.s32.totalorder %s36, 0
      %p318 = por %p316, %p317
      %p319 = scmp.ne.s32.totalorder %s305, %s306
      %p320 = scmp.eq.s32.totalorder %s37, 1
      %p321 = por %p319, %p320
      %p323 = scmp.ne.s32.totalorder %s306, %s322
      %p324 = scmp.eq.s32.totalorder %s37, 0
      %p325 = por %p323, %p324
      %p326 = scmp.le.s32.totalorder 1, %s31
      %p327 = scmp.lt.s32.totalorder %s31, 3
      %p328 = pnand %p326, %p327
      %p329 = pneg %p328
      // Predicated region
      $region9: #{tpu_custom_call.1} parent=5 // pred_check
        _
      $region10: #{tpu_custom_call.1} parent=5 // pred_check_branch
        %331 = sbr.rel (%p328) target = $region12
      $region11: #{tpu_custom_call.1} parent=5 // pred_region
        %s332 = ssub.s32 %s31, 1
        // Predicated region
        $region13: #{tpu_custom_call.1} parent=11 // pred_check
          %p333 = pneg %p156
        $region14: #{tpu_custom_call.1} parent=11 // pred_check_branch
          %335 = sbr.rel (%p333) target = $region16
        $region15: #{tpu_custom_call.1} parent=11 // pred_region
          %s337 = ssub.s32 2048, 2048
          %338 = vsyncadd [#allocation6], %s337
          %s339 = sshll.u32 [#allocation7], 4
          %s340 = int_to_ptr.vmem [resolvable:$true] %s339
          %345 = dma.hbm_to_vmem [thread:$0]  %s4, 2048, %s340, [#allocation6], 128, 128, 8
        $region16: #{tpu_custom_call.1} parent=11 // pred_fallthru
          _
        // Predicated region
        $region17: #{tpu_custom_call.1} parent=11 // pred_check
          %p346 = pneg %p177
        $region18: #{tpu_custom_call.1} parent=11 // pred_check_branch
          %348 = sbr.rel (%p346) target = $region20
        $region19: #{tpu_custom_call.1} parent=11 // pred_region
          _
        $region20: #{tpu_custom_call.1} parent=11 // pred_fallthru
          _
        // Predicated region
        $region21: #{tpu_custom_call.1} parent=11 // pred_check
          %p349 = pneg %p198
        $region22: #{tpu_custom_call.1} parent=11 // pred_check_branch
          %351 = sbr.rel (%p349) target = $region24
        $region23: #{tpu_custom_call.1} parent=11 // pred_region
          _
        $region24: #{tpu_custom_call.1} parent=11 // pred_fallthru
          _
        // Predicated region
        $region25: #{tpu_custom_call.1} parent=11 // pred_check
          %p352 = pneg %p219
        $region26: #{tpu_custom_call.1} parent=11 // pred_check_branch
          %354 = sbr.rel (%p352) target = $region28
        $region27: #{tpu_custom_call.1} parent=11 // pred_region
          %s356 = ssub.s32 2048, 2048
          %357 = vsyncadd [#allocation9], %s356
          %s358 = sshll.u32 [#allocation8], 4
          %s359 = int_to_ptr.vmem [resolvable:$true] %s358
          %364 = dma.hbm_to_vmem [thread:$0]  %s7, 2048, %s359, [#allocation9], 128, 128, 8
        $region28: #{tpu_custom_call.1} parent=11 // pred_fallthru
          _
        // Predicated region
        $region29: #{tpu_custom_call.1} parent=11 // pred_check
          %p365 = pneg %p240
        $region30: #{tpu_custom_call.1} parent=11 // pred_check_branch
          %367 = sbr.rel (%p365) target = $region32
        $region31: #{tpu_custom_call.1} parent=11 // pred_region
          %s369 = ssub.s32 2048, 2048
          %370 = vsyncadd [#allocation9], %s369
          %s371 = sshll.u32 [#allocation10], 4
          %s372 = int_to_ptr.vmem [resolvable:$true] %s371
          %377 = dma.hbm_to_vmem [thread:$0]  %s8, 2048, %s372, [#allocation9], 128, 128, 8
        $region32: #{tpu_custom_call.1} parent=11 // pred_fallthru
          _
      $region12: #{tpu_custom_call.1} parent=5 // pred_fallthru
        _
      %p378 = scmp.lt.s32.totalorder %s31, 2
      // Predicated region
      $region33: #{tpu_custom_call.1} parent=5 // pred_check
        %p379 = pneg %p378
      $region34: #{tpu_custom_call.1} parent=5 // pred_check_branch
        %381 = sbr.rel (%p379) target = $region36
      $region35: #{tpu_custom_call.1} parent=5 // pred_region
        // Predicated region
        $region37: #{tpu_custom_call.1} parent=35 // pred_check
          %p382 = pneg %p51
        $region38: #{tpu_custom_call.1} parent=35 // pred_check_branch
          %384 = sbr.rel (%p382) target = $region40
        $region39: #{tpu_custom_call.1} parent=35 // pred_region
          %p385 = scmp.lt.s32.totalorder %s31, 1
          %s386 = scalar_select %p385, %s31, 1
          %s387 = smul.addr %s386, 8
          %s388 = scalar_lea.vmem %s0, %s387
        $region40: #{tpu_custom_call.1} parent=35 // pred_fallthru
          _
        // Predicated region
        $region41: #{tpu_custom_call.1} parent=35 // pred_check
          %p389 = pneg %p77
        $region42: #{tpu_custom_call.1} parent=35 // pred_check_branch
          %391 = sbr.rel (%p389) target = $region44
        $region43: #{tpu_custom_call.1} parent=35 // pred_region
          %s392 = sand.u32 %s67, 1
          %s393 = scalar_lea.sflag [#allocation3], %s392
          %s394 = sand.u32 %s67, 1
          %s395 = smul.addr %s394, 8
          %s396 = scalar_lea.vmem [#allocation2], %s395
          %s398 = ssub.s32 128, 128
          %399 = vsyncadd %s393, %s398
          %s400 = smul.addr %s31, 128
          %s401 = scalar_lea.hbm %s1, %s400
          %s403 = sshll.u32 %s396, 4
          %s404 = int_to_ptr.vmem [resolvable:$true] %s403
          %406 = dma.hbm_to_vmem [thread:$0]  %s401, 128, %s404, %s393
        $region44: #{tpu_custom_call.1} parent=35 // pred_fallthru
          _
        // Predicated region
        $region45: #{tpu_custom_call.1} parent=35 // pred_check
          %p407 = pneg %p103
        $region46: #{tpu_custom_call.1} parent=35 // pred_check_branch
          %409 = sbr.rel (%p407) target = $region48
        $region47: #{tpu_custom_call.1} parent=35 // pred_region
          %s410 = sand.u32 %s31, 1
          %s411 = scalar_lea.sflag [#allocation6], %s410
          %s412 = sand.u32 %s93, 1
          %s413 = smul.addr %s412, 64
          %s414 = scalar_lea.vmem [#allocation5], %s413
          %s415 = smul.u32 8, %s31
          %s417 = ssub.s32 1024, 1024
          %418 = vsyncadd %s411, %s417
          %s419 = smul.addr %s415, 128
          %s420 = scalar_lea.hbm %s2, %s419
          %s421 = sshll.u32 %s414, 4
          %s422 = int_to_ptr.vmem [resolvable:$true] %s421
          %427 = dma.hbm_to_vmem [thread:$0]  %s420, 1024, %s422, %s411, 128, 128, 8
        $region48: #{tpu_custom_call.1} parent=35 // pred_fallthru
          _
        // Predicated region
        $region49: #{tpu_custom_call.1} parent=35 // pred_check
          %p428 = pneg %p129
        $region50: #{tpu_custom_call.1} parent=35 // pred_check_branch
          %430 = sbr.rel (%p428) target = $region52
        $region51: #{tpu_custom_call.1} parent=35 // pred_region
          %p431 = scmp.lt.s32.totalorder %s31, 1
          %s432 = scalar_select %p431, %s31, 1
          %s433 = smul.addr %s432, 8
          %s434 = scalar_lea.vmem %s3, %s433
        $region52: #{tpu_custom_call.1} parent=35 // pred_fallthru
          _
      $region36: #{tpu_custom_call.1} parent=5 // pred_fallthru
        _
      %p435 = scmp.le.s32.totalorder 1, %s31
      %p436 = scmp.lt.s32.totalorder %s31, 3
      %p437 = pnand %p435, %p436
      %p438 = pneg %p437
      // Predicated region
      $region53: #{tpu_custom_call.1} parent=5 // pred_check
        _
      $region54: #{tpu_custom_call.1} parent=5 // pred_check_branch
        %440 = sbr.rel (%p437) target = $region56
      $region55: #{tpu_custom_call.1} parent=5 // pred_region
        %s441 = ssub.s32 %s31, 1
        %s442 = sand.u32 %s70, 1
        %s443 = scalar_lea.sflag [#allocation3], %s442
        %s444 = sand.u32 %s70, 1
        %s445 = smul.addr %s444, 8
        %s446 = scalar_lea.vmem [#allocation2], %s445
        // Predicated region
        $region57: #{tpu_custom_call.1} parent=55 // pred_check
          %p447 = pneg %p83
        $region58: #{tpu_custom_call.1} parent=55 // pred_check_branch
          %449 = sbr.rel (%p447) target = $region60
        $region59: #{tpu_custom_call.1} parent=55 // pred_region
          %450 = dma.done %s443, 128
        $region60: #{tpu_custom_call.1} parent=55 // pred_fallthru
          _
        %s451 = sand.u32 %s36, 1
        %s452 = scalar_lea.sflag [#allocation6], %s451
        %s453 = sand.u32 %s96, 1
        %s454 = smul.addr %s453, 64
        %s455 = scalar_lea.vmem [#allocation5], %s454
        // Predicated region
        $region61: #{tpu_custom_call.1} parent=55 // pred_check
          %p456 = pneg %p109
        $region62: #{tpu_custom_call.1} parent=55 // pred_check_branch
          %458 = sbr.rel (%p456) target = $region64
        $region63: #{tpu_custom_call.1} parent=55 // pred_region
          %459 = dma.done %s452, 1024
        $region64: #{tpu_custom_call.1} parent=55 // pred_fallthru
          _
        // Predicated region
        $region65: #{tpu_custom_call.1} parent=55 // pred_check
          %p460 = pneg %p156
        $region66: #{tpu_custom_call.1} parent=55 // pred_check_branch
          %462 = sbr.rel (%p460) target = $region68
        $region67: #{tpu_custom_call.1} parent=55 // pred_region
          %463 = dma.done [#allocation6], 2048
        $region68: #{tpu_custom_call.1} parent=55 // pred_fallthru
          _
        // Predicated region
        $region69: #{tpu_custom_call.1} parent=55 // pred_check
          %p464 = pneg %p219
        $region70: #{tpu_custom_call.1} parent=55 // pred_check_branch
          %466 = sbr.rel (%p464) target = $region72
        $region71: #{tpu_custom_call.1} parent=55 // pred_region
          %467 = dma.done [#allocation9], 2048
        $region72: #{tpu_custom_call.1} parent=55 // pred_fallthru
          _
        // Predicated region
        $region73: #{tpu_custom_call.1} parent=55 // pred_check
          %p468 = pneg %p240
        $region74: #{tpu_custom_call.1} parent=55 // pred_check_branch
          %470 = sbr.rel (%p468) target = $region76
        $region75: #{tpu_custom_call.1} parent=55 // pred_region
          %471 = dma.done [#allocation9], 2048
        $region76: #{tpu_custom_call.1} parent=55 // pred_fallthru
          _
        %p472 = scmp.lt.s32.totalorder %s36, 1
        %s473 = scalar_select %p472, %s36, 1
        %s474 = smul.addr %s473, 8
        %s475 = scalar_lea.vmem %s0, %s474
        %p476 = pneg %p57
        %p477 = pneg %p54
        %s478 = sand.u32 %s70, 1
        %s479 = scalar_lea.sflag [#allocation3], %s478
        %s480 = sand.u32 %s70, 1
        %s481 = smul.addr %s480, 8
        %s482 = scalar_lea.vmem [#allocation2], %s481
        %p483 = pneg %p83
        %p484 = pneg %p80
        %s485 = sand.u32 %s36, 1
        %s486 = scalar_lea.sflag [#allocation6], %s485
        %s487 = sand.u32 %s96, 1
        %s488 = smul.addr %s487, 64
        %s489 = scalar_lea.vmem [#allocation5], %s488
        %p490 = pneg %p109
        %p491 = pneg %p106
        %p492 = scmp.lt.s32.totalorder %s36, 1
        %s493 = scalar_select %p492, %s36, 1
        %s494 = smul.addr %s493, 8
        %s495 = scalar_lea.vmem %s3, %s494
        %p496 = pneg %p135
        %p497 = pneg %p132
        %p498 = pneg %p156
        %p499 = pneg %p153
        %p500 = pneg %p177
        %p501 = pneg %p174
        %p502 = pneg %p198
        %p503 = pneg %p195
        %p504 = pneg %p219
        %p505 = pneg %p216
        %p506 = pneg %p240
        %p507 = pneg %p237
        %p508 = pneg %p266
        %p509 = pneg %p263
        %s510 = sand.u32 %s253, 1
        %s511 = scalar_lea.sflag [#allocation4], %s510
        %s512 = sand.u32 %s253, 1
        %s513 = smul.addr %s512, 8
        %s514 = scalar_lea.vmem [#allocation11], %s513
        %p515 = pneg %p292
        %p516 = pneg %p289
        %s517 = sand.u32 %s279, 1
        %s518 = scalar_lea.sflag [#allocation13], %s517
        %s519 = sand.u32 %s279, 1
        %s520 = smul.addr %s519, 8
        %s521 = scalar_lea.vmem [#allocation12], %s520
        %p522 = pneg %p318
        %p523 = pneg %p315
        %p524 = scmp.lt.s32.totalorder %s36, 1
        %s525 = scalar_select %p524, %s36, 1
        %s526 = smul.addr %s525, 8
        %s527 = scalar_lea.vmem %s11, %s526
        %p528 = scmp.lt.s32.totalorder %s36, 1
        %s529 = scalar_select %p528, %s36, 1
        %s530 = smul.addr %s529, 8
        %s531 = scalar_lea.vmem %s0, %s530
        %s532 = smul.u32 8, %s36
        %p533 = scmp.lt.s32.totalorder %s36, 1
        %s534 = scalar_select %p533, %s36, 1
        %s535 = smul.addr %s534, 8
        %s536 = scalar_lea.vmem %s3, %s535
        %p537 = scmp.lt.s32.totalorder %s36, 1
        %s538 = scalar_select %p537, %s36, 1
        %s539 = smul.addr %s538, 8
        %s540 = scalar_lea.vmem %s11, %s539
        %v541 = vld [vmem:[%s455] sm:$0xff]
        %v542 = vld [vmem:[%s455 + $0x8] sm:$0xff]
        %v543 = vld [vmem:[%s455 + $0x10] sm:$0xff]
        %v544 = vld [vmem:[%s455 + $0x18] sm:$0xff]
        %v545 = vld [vmem:[%s455 + $0x20] sm:$0xff]
        %v546 = vld [vmem:[%s455 + $0x28] sm:$0xff]
        %v547 = vld [vmem:[%s455 + $0x30] sm:$0xff]
        %v548 = vld [vmem:[%s455 + $0x38] sm:$0xff]
        %v549 = vld [vmem:[#allocation7] sm:$0xff]
        %v550 = vld [vmem:[#allocation7 + $0x8] sm:$0xff]
        %v551 = vld [vmem:[#allocation7 + $0x10] sm:$0xff]
        %v552 = vld [vmem:[#allocation7 + $0x18] sm:$0xff]
        %v553 = vld [vmem:[#allocation7 + $0x20] sm:$0xff]
        %v554 = vld [vmem:[#allocation7 + $0x28] sm:$0xff]
        %v555 = vld [vmem:[#allocation7 + $0x30] sm:$0xff]
        %v556 = vld [vmem:[#allocation7 + $0x38] sm:$0xff]
        %v557 = vld [vmem:[#allocation7 + $0x40] sm:$0xff]
        %v558 = vld [vmem:[#allocation7 + $0x48] sm:$0xff]
        %v559 = vld [vmem:[#allocation7 + $0x50] sm:$0xff]
        %v560 = vld [vmem:[#allocation7 + $0x58] sm:$0xff]
        %v561 = vld [vmem:[#allocation7 + $0x60] sm:$0xff]
        %v562 = vld [vmem:[#allocation7 + $0x68] sm:$0xff]
        %v563 = vld [vmem:[#allocation7 + $0x70] sm:$0xff]
        %v564 = vld [vmem:[#allocation7 + $0x78] sm:$0xff]
        %v565 = vld [vmem:[%s5] sm:$0x1]
        %v567 = vlaneseq
        %v568 = vshrl.u32 %v567, 7
        %v569 = vsub.s32 0, %v568
        %v570 = vrot.slane %v565, %v569
        %572 = vmatprep.subr.mxu0 0.0
        %573 = vmatpush1.msra.mxu0 %v564
        %574 = vmatprep.subr.mxu0 0.0
        %575 = vmatpush1.msra.mxu0 %v563
        %576 = vmatprep.subr.mxu0 0.0
        %577 = vmatpush1.msra.mxu0 %v562
        %578 = vmatprep.subr.mxu0 0.0
        %579 = vmatpush1.msra.mxu0 %v561
        %580 = vmatprep.subr.mxu0 0.0
        %581 = vmatpush1.msra.mxu0 %v560
        %582 = vmatprep.subr.mxu0 0.0
        %583 = vmatpush1.msra.mxu0 %v559
        %584 = vmatprep.subr.mxu0 0.0
        %585 = vmatpush1.msra.mxu0 %v558
        %586 = vmatprep.subr.mxu0 0.0
        %587 = vmatpush1.msra.mxu0 %v557
        %588 = vmatprep.subr.mxu0 0.0
        %589 = vmatpush1.msra.mxu0 %v556
        %590 = vmatprep.subr.mxu0 0.0
        %591 = vmatpush1.msra.mxu0 %v555
        %592 = vmatprep.subr.mxu0 0.0
        %593 = vmatpush1.msra.mxu0 %v554
        %594 = vmatprep.subr.mxu0 0.0
        %595 = vmatpush1.msra.mxu0 %v553
        %596 = vmatprep.subr.mxu0 0.0
        %597 = vmatpush1.msra.mxu0 %v552
        %598 = vmatprep.subr.mxu0 0.0
        %599 = vmatpush1.msra.mxu0 %v551
        %600 = vmatprep.subr.mxu0 0.0
        %601 = vmatpush1.msra.mxu0 %v550
        %602 = vmatprep.subr.mxu0 0.0
        %603 = vmatpush1.msra.mxu0 %v549
        %604 = vmatprep.subr.mxu0 0.0
        %605 = vmatpush2.msra.mxu0 0.0
        %606 = vmatprep.subr.mxu0 0.0
        %607 = vmatpush2.msra.mxu0 0.0
        %608 = vmatprep.subr.mxu0 0.0
        %609 = vmatpush2.msra.mxu0 0.0
        %610 = vmatprep.subr.mxu0 0.0
        %611 = vmatpush2.msra.mxu0 0.0
        %612 = vmatprep.subr.mxu0 0.0
        %613 = vmatpush2.msra.mxu0 0.0
        %614 = vmatprep.subr.mxu0 0.0
        %615 = vmatpush2.msra.mxu0 0.0
        %616 = vmatprep.subr.mxu0 0.0
        %617 = vmatpush2.msra.mxu0 0.0
        %618 = vmatprep.subr.mxu0 0.0
        %619 = vmatpush2.msra.mxu0 0.0
        %620 = vmatprep.subr.mxu0 0.0
        %621 = vmatpush2.msra.mxu0 0.0
        %622 = vmatprep.subr.mxu0 0.0
        %623 = vmatpush2.msra.mxu0 0.0
        %624 = vmatprep.subr.mxu0 0.0
        %625 = vmatpush2.msra.mxu0 0.0
        %626 = vmatprep.subr.mxu0 0.0
        %627 = vmatpush2.msra.mxu0 0.0
        %628 = vmatprep.subr.mxu0 0.0
        %629 = vmatpush2.msra.mxu0 0.0
        %630 = vmatprep.subr.mxu0 0.0
        %631 = vmatpush2.msra.mxu0 0.0
        %632 = vmatprep.subr.mxu0 0.0
        %633 = vmatpush2.msra.mxu0 0.0
        %634 = vmatprep.subr.mxu0 0.0
        %635 = vmatpush2.msra.mxu0 0.0
        %636 = vmatprep.mubr.f32.mxu0 0.0
        %637 = vmatmul.mubr.f32.gmra.mxu0 %v541
        %v638 = vpop.f32.mrf.mxu0
        %v639 = vadd.f32 %v570, %v638
        %v640 = vpop.f32.mrf.mxu0
        %641 = vmatprep.mubr.f32.mxu0 0.0
        %642 = vmatmul.mubr.f32.gmra.mxu0 %v542
        %v643 = vpop.f32.mrf.mxu0
        %v644 = vadd.f32 %v570, %v643
        %v645 = vpop.f32.mrf.mxu0
        %646 = vmatprep.mubr.f32.mxu0 0.0
        %647 = vmatmul.mubr.f32.gmra.mxu0 %v543
        %v648 = vpop.f32.mrf.mxu0
        %v649 = vadd.f32 %v570, %v648
        %v650 = vpop.f32.mrf.mxu0
        %651 = vmatprep.mubr.f32.mxu0 0.0
        %652 = vmatmul.mubr.f32.gmra.mxu0 %v544
        %v653 = vpop.f32.mrf.mxu0
        %v654 = vadd.f32 %v570, %v653
        %v655 = vpop.f32.mrf.mxu0
        %656 = vmatprep.mubr.f32.mxu0 0.0
        %657 = vmatmul.mubr.f32.gmra.mxu0 %v545
        %v658 = vpop.f32.mrf.mxu0
        %v659 = vadd.f32 %v570, %v658
        %v660 = vpop.f32.mrf.mxu0
        %661 = vmatprep.mubr.f32.mxu0 0.0
        %662 = vmatmul.mubr.f32.gmra.mxu0 %v546
        %v663 = vpop.f32.mrf.mxu0
        %v664 = vadd.f32 %v570, %v663
        %v665 = vpop.f32.mrf.mxu0
        %666 = vmatprep.mubr.f32.mxu0 0.0
        %667 = vmatmul.mubr.f32.gmra.mxu0 %v547
        %v668 = vpop.f32.mrf.mxu0
        %v669 = vadd.f32 %v570, %v668
        %v670 = vpop.f32.mrf.mxu0
        %671 = vmatprep.mubr.f32.mxu0 0.0
        %672 = vmatmul.mubr.f32.gmra.mxu0 %v548
        %v673 = vpop.f32.mrf.mxu0
        %v674 = vadd.f32 %v570, %v673
        %v675 = vpop.f32.mrf.mxu0
        %676 = vdwg.mxu0
        %v677 = vld [vmem:[%s531] sm:$0xff]
        %v679 = vcombine.high %v677, %v677
        %v681 = vunpack.c.l.s4 1966171168
        %v682 = vunpack.c.0.s8 %v681
        %v683 = vlaneseq
        %v684 = vshrl.u32 %v683, 7
        %v685 = vsub.s32 %v682, %v684
        %v686 = vrot.slane %v677, %v685
        %v688 = vunpack.c.l.s4 1966171168
        %v689 = vunpack.c.0.s8 %v688
        %v690 = vlaneseq
        %v691 = vshrl.u32 %v690, 7
        %v692 = vsub.s32 %v689, %v691
        %v693 = vrot.slane %v679, %v692
        %v694 = vcombine.high %v686, %v686
        %v695 = vcombine.high %v693, %v693
        %v697 = vunpack.c.l.s4 1966171168
        %v698 = vunpack.c.0.s8 %v697
        %v699 = vlaneseq
        %v700 = vshrl.u32 %v699, 7
        %v701 = vsub.s32 %v698, %v700
        %v702 = vrot.slane %v686, %v701
        %v704 = vunpack.c.l.s4 1966171168
        %v705 = vunpack.c.0.s8 %v704
        %v706 = vlaneseq
        %v707 = vshrl.u32 %v706, 7
        %v708 = vsub.s32 %v705, %v707
        %v709 = vrot.slane %v693, %v708
        %v711 = vunpack.c.l.s4 1966171168
        %v712 = vunpack.c.0.s8 %v711
        %v713 = vlaneseq
        %v714 = vshrl.u32 %v713, 7
        %v715 = vsub.s32 %v712, %v714
        %v716 = vrot.slane %v694, %v715
        %v718 = vunpack.c.l.s4 1966171168
        %v719 = vunpack.c.0.s8 %v718
        %v720 = vlaneseq
        %v721 = vshrl.u32 %v720, 7
        %v722 = vsub.s32 %v719, %v721
        %v723 = vrot.slane %v695, %v722
        %v724 = vcombine.high %v702, %v702
        %v725 = vcombine.high %v709, %v709
        %v726 = vcombine.high %v716, %v716
        %v727 = vcombine.high %v723, %v723
        %v728 = vlaneseq
        %v729 = vshrl.u32 %v728, 7
        %v730 = vsub.s32 0, %v729
        %v731 = vrot.slane %v702, %v730
        %v732 = vlaneseq
        %v733 = vshrl.u32 %v732, 7
        %v734 = vsub.s32 0, %v733
        %v735 = vrot.slane %v716, %v734
        %v736 = vlaneseq
        %v737 = vshrl.u32 %v736, 7
        %v738 = vsub.s32 0, %v737
        %v739 = vrot.slane %v724, %v738
        %v740 = vlaneseq
        %v741 = vshrl.u32 %v740, 7
        %v742 = vsub.s32 0, %v741
        %v743 = vrot.slane %v726, %v742
        %v744 = vlaneseq
        %v745 = vshrl.u32 %v744, 7
        %v746 = vsub.s32 0, %v745
        %v747 = vrot.slane %v709, %v746
        %v748 = vlaneseq
        %v749 = vshrl.u32 %v748, 7
        %v750 = vsub.s32 0, %v749
        %v751 = vrot.slane %v723, %v750
        %v752 = vlaneseq
        %v753 = vshrl.u32 %v752, 7
        %v754 = vsub.s32 0, %v753
        %v755 = vrot.slane %v725, %v754
        %v756 = vlaneseq
        %v757 = vshrl.u32 %v756, 7
        %v758 = vsub.s32 0, %v757
        %v759 = vrot.slane %v727, %v758
        %v768 = vadd.f32 %v639, %v731
        %v769 = vadd.f32 %v644, %v735
        %v770 = vadd.f32 %v649, %v739
        %v771 = vadd.f32 %v654, %v743
        %v772 = vadd.f32 %v659, %v747
        %v773 = vadd.f32 %v664, %v751
        %v774 = vadd.f32 %v669, %v755
        %v775 = vadd.f32 %v674, %v759
        %v776 = vtanh.pop %v768
        %v777 = vtanh.pop %v769
        %v778 = vtanh.pop %v770
        %v779 = vtanh.pop %v771
        %v780 = vtanh.pop %v772
        %v781 = vtanh.pop %v773
        %v782 = vtanh.pop %v774
        %v783 = vtanh.pop %v775
        %v784 = vld [vmem:[%s6] sm:$0x1]
        %v786 = vlaneseq
        %v787 = vshrl.u32 %v786, 7
        %v788 = vsub.s32 0, %v787
        %v789 = vrot.slane %v784, %v788
        %v791 = vmul.f32 %v776, %v789
        %v792 = vmul.f32 %v777, %v789
        %v793 = vmul.f32 %v778, %v789
        %v794 = vmul.f32 %v779, %v789
        %v795 = vmul.f32 %v780, %v789
        %v796 = vmul.f32 %v781, %v789
        %v797 = vmul.f32 %v782, %v789
        %v798 = vmul.f32 %v783, %v789
        %799 = vadd.xlane.f32.xlu0 %v791
        %v800 = vpop.xlane.xlu0 %799
        %801 = vadd.xlane.f32.xlu0 %v792
        %v802 = vpop.xlane.xlu0 %801
        %803 = vadd.xlane.f32.xlu0 %v793
        %v804 = vpop.xlane.xlu0 %803
        %805 = vadd.xlane.f32.xlu0 %v794
        %v806 = vpop.xlane.xlu0 %805
        %807 = vadd.xlane.f32.xlu0 %v795
        %v808 = vpop.xlane.xlu0 %807
        %809 = vadd.xlane.f32.xlu0 %v796
        %v810 = vpop.xlane.xlu0 %809
        %811 = vadd.xlane.f32.xlu0 %v797
        %v812 = vpop.xlane.xlu0 %811
        %813 = vadd.xlane.f32.xlu0 %v798
        %v814 = vpop.xlane.xlu0 %813
        %v815 = vld [vmem:[%s536] sm:$0xff]
        %v817 = vlaneseq
        %v818 = vshrl.u32 %v817, 7
        %v819 = vsub.s32 0, %v818
        %v820 = vrot.slane %v815, %v819
        %822 = vbcast.lane.b32.xlu0 %v820, 256
        %v823 = vpop.permute.xlu0 %822
        %v824 = vlaneseq
        %v825 = vshrl.u32 %v824, 7
        %v826 = vsub.s32 1, %v825
        %v827 = vrot.slane %v815, %v826
        %829 = vbcast.lane.b32.xlu0 %v827, 256
        %v830 = vpop.permute.xlu0 %829
        %v831 = vlaneseq
        %v832 = vshrl.u32 %v831, 7
        %v833 = vsub.s32 2, %v832
        %v834 = vrot.slane %v815, %v833
        %836 = vbcast.lane.b32.xlu0 %v834, 256
        %v837 = vpop.permute.xlu0 %836
        %v838 = vlaneseq
        %v839 = vshrl.u32 %v838, 7
        %v840 = vsub.s32 3, %v839
        %v841 = vrot.slane %v815, %v840
        %843 = vbcast.lane.b32.xlu0 %v841, 256
        %v844 = vpop.permute.xlu0 %843
        %v845 = vlaneseq
        %v846 = vshrl.u32 %v845, 7
        %v847 = vsub.s32 4, %v846
        %v848 = vrot.slane %v815, %v847
        %850 = vbcast.lane.b32.xlu0 %v848, 256
        %v851 = vpop.permute.xlu0 %850
        %v852 = vlaneseq
        %v853 = vshrl.u32 %v852, 7
        %v854 = vsub.s32 5, %v853
        %v855 = vrot.slane %v815, %v854
        %857 = vbcast.lane.b32.xlu0 %v855, 256
        %v858 = vpop.permute.xlu0 %857
        %v859 = vlaneseq
        %v860 = vshrl.u32 %v859, 7
        %v861 = vsub.s32 6, %v860
        %v862 = vrot.slane %v815, %v861
        %864 = vbcast.lane.b32.xlu0 %v862, 256
        %v865 = vpop.permute.xlu0 %864
        %v866 = vlaneseq
        %v867 = vshrl.u32 %v866, 7
        %v868 = vsub.s32 7, %v867
        %v869 = vrot.slane %v815, %v868
        %871 = vbcast.lane.b32.xlu0 %v869, 256
        %v872 = vpop.permute.xlu0 %871
        %v881 = vadd.f32 %v800, %v823
        %v882 = vadd.f32 %v802, %v830
        %v883 = vadd.f32 %v804, %v837
        %v884 = vadd.f32 %v806, %v844
        %v885 = vadd.f32 %v808, %v851
        %v886 = vadd.f32 %v810, %v858
        %v887 = vadd.f32 %v812, %v865
        %v888 = vadd.f32 %v814, %v872
        %897 = vset.pattern.permute.xlu0 0
        %898 = vperm.xlu0 %897, %v881
        %v899 = vpop.permute.xlu0 %898
        %900 = vset.pattern.permute.xlu0 0
        %901 = vperm.xlu0 %900, %v882
        %v902 = vpop.permute.xlu0 %901
        %903 = vset.pattern.permute.xlu0 0
        %904 = vperm.xlu0 %903, %v883
        %v905 = vpop.permute.xlu0 %904
        %906 = vset.pattern.permute.xlu0 0
        %907 = vperm.xlu0 %906, %v884
        %v908 = vpop.permute.xlu0 %907
        %909 = vset.pattern.permute.xlu0 0
        %910 = vperm.xlu0 %909, %v885
        %v911 = vpop.permute.xlu0 %910
        %912 = vset.pattern.permute.xlu0 0
        %913 = vperm.xlu0 %912, %v886
        %v914 = vpop.permute.xlu0 %913
        %915 = vset.pattern.permute.xlu0 0
        %916 = vperm.xlu0 %915, %v887
        %v917 = vpop.permute.xlu0 %916
        %918 = vset.pattern.permute.xlu0 0
        %919 = vperm.xlu0 %918, %v888
        %v920 = vpop.permute.xlu0 %919
        %v921 = vlaneseq
        %v922 = vand.u32 %v921, 127
        %v923 = vlaneseq
        %v924 = vshrl.u32 %v923, 7
        %v925 = vsub.s32 %v922, %v924
        %v926 = vrot.slane %v899, %v925
        %v927 = vlaneseq
        %v928 = vshrl.u32 %v927, 7
        %v929 = vsub.s32 %v922, %v928
        %v930 = vrot.slane %v902, %v929
        %v931 = vlaneseq
        %v932 = vshrl.u32 %v931, 7
        %v933 = vsub.s32 %v922, %v932
        %v934 = vrot.slane %v905, %v933
        %v935 = vlaneseq
        %v936 = vshrl.u32 %v935, 7
        %v937 = vsub.s32 %v922, %v936
        %v938 = vrot.slane %v908, %v937
        %v939 = vlaneseq
        %v940 = vshrl.u32 %v939, 7
        %v941 = vsub.s32 %v922, %v940
        %v942 = vrot.slane %v911, %v941
        %v943 = vlaneseq
        %v944 = vshrl.u32 %v943, 7
        %v945 = vsub.s32 %v922, %v944
        %v946 = vrot.slane %v914, %v945
        %v947 = vlaneseq
        %v948 = vshrl.u32 %v947, 7
        %v949 = vsub.s32 %v922, %v948
        %v950 = vrot.slane %v917, %v949
        %v951 = vlaneseq
        %v952 = vshrl.u32 %v951, 7
        %v953 = vsub.s32 %v922, %v952
        %v954 = vrot.slane %v920, %v953
        %vm955 = vcmask 1041409
        %v956 = vsel %vm955, %v930, %v926
        %vm957 = vcmask 1042434
        %v958 = vsel %vm957, %v934, %v956
        %vm959 = vcmask 1043459
        %v960 = vsel %vm959, %v938, %v958
        %vm961 = vcmask 1044484
        %v962 = vsel %vm961, %v942, %v960
        %vm963 = vcmask 1045509
        %v964 = vsel %vm963, %v946, %v962
        %vm965 = vcmask 1046534
        %v966 = vsel %vm965, %v950, %v964
        %vm967 = vcmask 1047559
        %v968 = vsel %vm967, %v954, %v966
        %vm970 = vcmask 64512
        %v971 = vsel %vm970, %v968, -inf
        %972 = vmax.xlane.f32.xlu0 %v971
        %v973 = vpop.xlane.xlu0 %972
        %v975 = vlaneseq
        %v976 = vshrl.u32 %v975, 7
        %v977 = vsub.s32 0, %v976
        %v978 = vrot.slane %v973, %v977
        %v979 = vlaneseq
        %v980 = vshrl.u32 %v979, 7
        %v981 = vsub.s32 1, %v980
        %v982 = vrot.slane %v973, %v981
        %v983 = vlaneseq
        %v984 = vshrl.u32 %v983, 7
        %v985 = vsub.s32 2, %v984
        %v986 = vrot.slane %v973, %v985
        %v987 = vlaneseq
        %v988 = vshrl.u32 %v987, 7
        %v989 = vsub.s32 3, %v988
        %v990 = vrot.slane %v973, %v989
        %v991 = vlaneseq
        %v992 = vshrl.u32 %v991, 7
        %v993 = vsub.s32 4, %v992
        %v994 = vrot.slane %v973, %v993
        %v995 = vlaneseq
        %v996 = vshrl.u32 %v995, 7
        %v997 = vsub.s32 5, %v996
        %v998 = vrot.slane %v973, %v997
        %v999 = vlaneseq
        %v1000 = vshrl.u32 %v999, 7
        %v1001 = vsub.s32 6, %v1000
        %v1002 = vrot.slane %v973, %v1001
        %v1003 = vlaneseq
        %v1004 = vshrl.u32 %v1003, 7
        %v1005 = vsub.s32 7, %v1004
        %v1006 = vrot.slane %v973, %v1005
        %v1015 = vsub.f32 %v881, %v978
        %v1016 = vsub.f32 %v882, %v982
        %v1017 = vsub.f32 %v883, %v986
        %v1018 = vsub.f32 %v884, %v990
        %v1019 = vsub.f32 %v885, %v994
        %v1020 = vsub.f32 %v886, %v998
        %v1021 = vsub.f32 %v887, %v1002
        %v1022 = vsub.f32 %v888, %v1006
        %v1023 = vmul.f32 %v1015, 1.442695
        %v1024 = vpow.pop %v1023
        %v1025 = vmul.f32 %v1016, 1.442695
        %v1026 = vpow.pop %v1025
        %v1027 = vmul.f32 %v1017, 1.442695
        %v1028 = vpow.pop %v1027
        %v1029 = vmul.f32 %v1018, 1.442695
        %v1030 = vpow.pop %v1029
        %v1031 = vmul.f32 %v1019, 1.442695
        %v1032 = vpow.pop %v1031
        %v1033 = vmul.f32 %v1020, 1.442695
        %v1034 = vpow.pop %v1033
        %v1035 = vmul.f32 %v1021, 1.442695
        %v1036 = vpow.pop %v1035
        %v1037 = vmul.f32 %v1022, 1.442695
        %v1038 = vpow.pop %v1037
        %1047 = vset.pattern.permute.xlu0 0
        %1048 = vperm.xlu0 %1047, %v1024
        %v1049 = vpop.permute.xlu0 %1048
        %1050 = vset.pattern.permute.xlu0 0
        %1051 = vperm.xlu0 %1050, %v1026
        %v1052 = vpop.permute.xlu0 %1051
        %1053 = vset.pattern.permute.xlu0 0
        %1054 = vperm.xlu0 %1053, %v1028
        %v1055 = vpop.permute.xlu0 %1054
        %1056 = vset.pattern.permute.xlu0 0
        %1057 = vperm.xlu0 %1056, %v1030
        %v1058 = vpop.permute.xlu0 %1057
        %1059 = vset.pattern.permute.xlu0 0
        %1060 = vperm.xlu0 %1059, %v1032
        %v1061 = vpop.permute.xlu0 %1060
        %1062 = vset.pattern.permute.xlu0 0
        %1063 = vperm.xlu0 %1062, %v1034
        %v1064 = vpop.permute.xlu0 %1063
        %1065 = vset.pattern.permute.xlu0 0
        %1066 = vperm.xlu0 %1065, %v1036
        %v1067 = vpop.permute.xlu0 %1066
        %1068 = vset.pattern.permute.xlu0 0
        %1069 = vperm.xlu0 %1068, %v1038
        %v1070 = vpop.permute.xlu0 %1069
        %v1071 = vlaneseq
        %v1072 = vshrl.u32 %v1071, 7
        %v1073 = vsub.s32 %v922, %v1072
        %v1074 = vrot.slane %v1049, %v1073
        %v1075 = vlaneseq
        %v1076 = vshrl.u32 %v1075, 7
        %v1077 = vsub.s32 %v922, %v1076
        %v1078 = vrot.slane %v1052, %v1077
        %v1079 = vlaneseq
        %v1080 = vshrl.u32 %v1079, 7
        %v1081 = vsub.s32 %v922, %v1080
        %v1082 = vrot.slane %v1055, %v1081
        %v1083 = vlaneseq
        %v1084 = vshrl.u32 %v1083, 7
        %v1085 = vsub.s32 %v922, %v1084
        %v1086 = vrot.slane %v1058, %v1085
        %v1087 = vlaneseq
        %v1088 = vshrl.u32 %v1087, 7
        %v1089 = vsub.s32 %v922, %v1088
        %v1090 = vrot.slane %v1061, %v1089
        %v1091 = vlaneseq
        %v1092 = vshrl.u32 %v1091, 7
        %v1093 = vsub.s32 %v922, %v1092
        %v1094 = vrot.slane %v1064, %v1093
        %v1095 = vlaneseq
        %v1096 = vshrl.u32 %v1095, 7
        %v1097 = vsub.s32 %v922, %v1096
        %v1098 = vrot.slane %v1067, %v1097
        %v1099 = vlaneseq
        %v1100 = vshrl.u32 %v1099, 7
        %v1101 = vsub.s32 %v922, %v1100
        %v1102 = vrot.slane %v1070, %v1101
        %v1103 = vsel %vm955, %v1078, %v1074
        %v1104 = vsel %vm957, %v1082, %v1103
        %v1105 = vsel %vm959, %v1086, %v1104
        %v1106 = vsel %vm961, %v1090, %v1105
        %v1107 = vsel %vm963, %v1094, %v1106
        %v1108 = vsel %vm965, %v1098, %v1107
        %v1109 = vsel %vm967, %v1102, %v1108
        %v1111 = vsel %vm970, %v1109, 0.0
        %1112 = vadd.xlane.f32.xlu0 %v1111
        %v1113 = vpop.xlane.xlu0 %1112
        %v1114 = vrcp.pop %v1113
        %v1116 = vlaneseq
        %v1117 = vshrl.u32 %v1116, 7
        %v1118 = vsub.s32 0, %v1117
        %v1119 = vrot.slane %v1114, %v1118
        %v1120 = vlaneseq
        %v1121 = vshrl.u32 %v1120, 7
        %v1122 = vsub.s32 1, %v1121
        %v1123 = vrot.slane %v1114, %v1122
        %v1124 = vlaneseq
        %v1125 = vshrl.u32 %v1124, 7
        %v1126 = vsub.s32 2, %v1125
        %v1127 = vrot.slane %v1114, %v1126
        %v1128 = vlaneseq
        %v1129 = vshrl.u32 %v1128, 7
        %v1130 = vsub.s32 3, %v1129
        %v1131 = vrot.slane %v1114, %v1130
        %v1132 = vlaneseq
        %v1133 = vshrl.u32 %v1132, 7
        %v1134 = vsub.s32 4, %v1133
        %v1135 = vrot.slane %v1114, %v1134
        %v1136 = vlaneseq
        %v1137 = vshrl.u32 %v1136, 7
        %v1138 = vsub.s32 5, %v1137
        %v1139 = vrot.slane %v1114, %v1138
        %v1140 = vlaneseq
        %v1141 = vshrl.u32 %v1140, 7
        %v1142 = vsub.s32 6, %v1141
        %v1143 = vrot.slane %v1114, %v1142
        %v1144 = vlaneseq
        %v1145 = vshrl.u32 %v1144, 7
        %v1146 = vsub.s32 7, %v1145
        %v1147 = vrot.slane %v1114, %v1146
        %v1156 = vmul.f32 %v1024, %v1119
        %v1157 = vmul.f32 %v1026, %v1123
        %v1158 = vmul.f32 %v1028, %v1127
        %v1159 = vmul.f32 %v1030, %v1131
        %v1160 = vmul.f32 %v1032, %v1135
        %v1161 = vmul.f32 %v1034, %v1139
        %v1162 = vmul.f32 %v1036, %v1143
        %v1163 = vmul.f32 %v1038, %v1147
        %1172 = vset.pattern.permute.xlu0 0
        %1173 = vperm.xlu0 %1172, %v1156
        %v1174 = vpop.permute.xlu0 %1173
        %1175 = vset.pattern.permute.xlu0 0
        %1176 = vperm.xlu0 %1175, %v1157
        %v1177 = vpop.permute.xlu0 %1176
        %1178 = vset.pattern.permute.xlu0 0
        %1179 = vperm.xlu0 %1178, %v1158
        %v1180 = vpop.permute.xlu0 %1179
        %1181 = vset.pattern.permute.xlu0 0
        %1182 = vperm.xlu0 %1181, %v1159
        %v1183 = vpop.permute.xlu0 %1182
        %1184 = vset.pattern.permute.xlu0 0
        %1185 = vperm.xlu0 %1184, %v1160
        %v1186 = vpop.permute.xlu0 %1185
        %1187 = vset.pattern.permute.xlu0 0
        %1188 = vperm.xlu0 %1187, %v1161
        %v1189 = vpop.permute.xlu0 %1188
        %1190 = vset.pattern.permute.xlu0 0
        %1191 = vperm.xlu0 %1190, %v1162
        %v1192 = vpop.permute.xlu0 %1191
        %1193 = vset.pattern.permute.xlu0 0
        %1194 = vperm.xlu0 %1193, %v1163
        %v1195 = vpop.permute.xlu0 %1194
        %v1196 = vlaneseq
        %v1197 = vshrl.u32 %v1196, 7
        %v1198 = vsub.s32 %v922, %v1197
        %v1199 = vrot.slane %v1174, %v1198
        %v1200 = vlaneseq
        %v1201 = vshrl.u32 %v1200, 7
        %v1202 = vsub.s32 %v922, %v1201
        %v1203 = vrot.slane %v1177, %v1202
        %v1204 = vlaneseq
        %v1205 = vshrl.u32 %v1204, 7
        %v1206 = vsub.s32 %v922, %v1205
        %v1207 = vrot.slane %v1180, %v1206
        %v1208 = vlaneseq
        %v1209 = vshrl.u32 %v1208, 7
        %v1210 = vsub.s32 %v922, %v1209
        %v1211 = vrot.slane %v1183, %v1210
        %v1212 = vlaneseq
        %v1213 = vshrl.u32 %v1212, 7
        %v1214 = vsub.s32 %v922, %v1213
        %v1215 = vrot.slane %v1186, %v1214
        %v1216 = vlaneseq
        %v1217 = vshrl.u32 %v1216, 7
        %v1218 = vsub.s32 %v922, %v1217
        %v1219 = vrot.slane %v1189, %v1218
        %v1220 = vlaneseq
        %v1221 = vshrl.u32 %v1220, 7
        %v1222 = vsub.s32 %v922, %v1221
        %v1223 = vrot.slane %v1192, %v1222
        %v1224 = vlaneseq
        %v1225 = vshrl.u32 %v1224, 7
        %v1226 = vsub.s32 %v922, %v1225
        %v1227 = vrot.slane %v1195, %v1226
        %v1228 = vsel %vm955, %v1203, %v1199
        %v1229 = vsel %vm957, %v1207, %v1228
        %v1230 = vsel %vm959, %v1211, %v1229
        %v1231 = vsel %vm961, %v1215, %v1230
        %v1232 = vsel %vm963, %v1219, %v1231
        %v1233 = vsel %vm965, %v1223, %v1232
        %v1234 = vsel %vm967, %v1227, %v1233
        %1236 = vst.msk [vmem:[%s540] sm:$0xff] %vm970, %v1234
        %v1245 = vmul.f32 %v1174, %v541
        %v1246 = vmul.f32 %v1177, %v542
        %v1247 = vmul.f32 %v1180, %v543
        %v1248 = vmul.f32 %v1183, %v544
        %v1249 = vmul.f32 %v1186, %v545
        %v1250 = vmul.f32 %v1189, %v546
        %v1251 = vmul.f32 %v1192, %v547
        %v1252 = vmul.f32 %v1195, %v548
        %v1253 = vrot.slane %v1245, 4
        %v1254 = vadd.f32 %v1245, %v1253
        %v1255 = vrot.slane %v1254, 2
        %v1256 = vadd.f32 %v1254, %v1255
        %v1257 = vrot.slane %v1256, 1
        %v1258 = vadd.f32 %v1256, %v1257
        %v1259 = vrot.slane %v1246, 4
        %v1260 = vadd.f32 %v1246, %v1259
        %v1261 = vrot.slane %v1260, 2
        %v1262 = vadd.f32 %v1260, %v1261
        %v1263 = vrot.slane %v1262, 1
        %v1264 = vadd.f32 %v1262, %v1263
        %v1265 = vrot.slane %v1247, 4
        %v1266 = vadd.f32 %v1247, %v1265
        %v1267 = vrot.slane %v1266, 2
        %v1268 = vadd.f32 %v1266, %v1267
        %v1269 = vrot.slane %v1268, 1
        %v1270 = vadd.f32 %v1268, %v1269
        %v1271 = vrot.slane %v1248, 4
        %v1272 = vadd.f32 %v1248, %v1271
        %v1273 = vrot.slane %v1272, 2
        %v1274 = vadd.f32 %v1272, %v1273
        %v1275 = vrot.slane %v1274, 1
        %v1276 = vadd.f32 %v1274, %v1275
        %v1277 = vrot.slane %v1249, 4
        %v1278 = vadd.f32 %v1249, %v1277
        %v1279 = vrot.slane %v1278, 2
        %v1280 = vadd.f32 %v1278, %v1279
        %v1281 = vrot.slane %v1280, 1
        %v1282 = vadd.f32 %v1280, %v1281
        %v1283 = vrot.slane %v1250, 4
        %v1284 = vadd.f32 %v1250, %v1283
        %v1285 = vrot.slane %v1284, 2
        %v1286 = vadd.f32 %v1284, %v1285
        %v1287 = vrot.slane %v1286, 1
        %v1288 = vadd.f32 %v1286, %v1287
        %v1289 = vrot.slane %v1251, 4
        %v1290 = vadd.f32 %v1251, %v1289
        %v1291 = vrot.slane %v1290, 2
        %v1292 = vadd.f32 %v1290, %v1291
        %v1293 = vrot.slane %v1292, 1
        %v1294 = vadd.f32 %v1292, %v1293
        %v1295 = vrot.slane %v1252, 4
        %v1296 = vadd.f32 %v1252, %v1295
        %v1297 = vrot.slane %v1296, 2
        %v1298 = vadd.f32 %v1296, %v1297
        %v1299 = vrot.slane %v1298, 1
        %v1300 = vadd.f32 %v1298, %v1299
        %v1309 = vsel %vm955, %v1264, %v1258
        %v1310 = vsel %vm957, %v1270, %v1309
        %v1311 = vsel %vm959, %v1276, %v1310
        %v1312 = vsel %vm961, %v1282, %v1311
        %v1313 = vsel %vm963, %v1288, %v1312
        %v1314 = vsel %vm965, %v1294, %v1313
        %v1315 = vsel %vm967, %v1300, %v1314
        %1317 = vst [vmem:[%s521] sm:$0xff] %v1315
        %v1318 = vld [vmem:[#allocation8] sm:$0xff]
        %v1319 = vld [vmem:[#allocation8 + $0x8] sm:$0xff]
        %v1320 = vld [vmem:[#allocation8 + $0x10] sm:$0xff]
        %v1321 = vld [vmem:[#allocation8 + $0x18] sm:$0xff]
        %v1322 = vld [vmem:[#allocation8 + $0x20] sm:$0xff]
        %v1323 = vld [vmem:[#allocation8 + $0x28] sm:$0xff]
        %v1324 = vld [vmem:[#allocation8 + $0x30] sm:$0xff]
        %v1325 = vld [vmem:[#allocation8 + $0x38] sm:$0xff]
        %v1326 = vld [vmem:[#allocation8 + $0x40] sm:$0xff]
        %v1327 = vld [vmem:[#allocation8 + $0x48] sm:$0xff]
        %v1328 = vld [vmem:[#allocation8 + $0x50] sm:$0xff]
        %v1329 = vld [vmem:[#allocation8 + $0x58] sm:$0xff]
        %v1330 = vld [vmem:[#allocation8 + $0x60] sm:$0xff]
        %v1331 = vld [vmem:[#allocation8 + $0x68] sm:$0xff]
        %v1332 = vld [vmem:[#allocation8 + $0x70] sm:$0xff]
        %v1333 = vld [vmem:[#allocation8 + $0x78] sm:$0xff]
        %v1334 = vld [vmem:[%s446] sm:$0xff]
        %v1335 = vld [vmem:[#allocation10] sm:$0xff]
        %v1336 = vld [vmem:[#allocation10 + $0x8] sm:$0xff]
        %v1337 = vld [vmem:[#allocation10 + $0x10] sm:$0xff]
        %v1338 = vld [vmem:[#allocation10 + $0x18] sm:$0xff]
        %v1339 = vld [vmem:[#allocation10 + $0x20] sm:$0xff]
        %v1340 = vld [vmem:[#allocation10 + $0x28] sm:$0xff]
        %v1341 = vld [vmem:[#allocation10 + $0x30] sm:$0xff]
        %v1342 = vld [vmem:[#allocation10 + $0x38] sm:$0xff]
        %v1343 = vld [vmem:[#allocation10 + $0x40] sm:$0xff]
        %v1344 = vld [vmem:[#allocation10 + $0x48] sm:$0xff]
        %v1345 = vld [vmem:[#allocation10 + $0x50] sm:$0xff]
        %v1346 = vld [vmem:[#allocation10 + $0x58] sm:$0xff]
        %v1347 = vld [vmem:[#allocation10 + $0x60] sm:$0xff]
        %v1348 = vld [vmem:[#allocation10 + $0x68] sm:$0xff]
        %v1349 = vld [vmem:[#allocation10 + $0x70] sm:$0xff]
        %v1350 = vld [vmem:[#allocation10 + $0x78] sm:$0xff]
        %1351 = vmatprep.subr.mxu0 0.0
        %1352 = vmatpush1.msra.mxu0 %v1350
        %1353 = vmatprep.subr.mxu0 0.0
        %1354 = vmatpush1.msra.mxu0 %v1349
        %1355 = vmatprep.subr.mxu0 0.0
        %1356 = vmatpush1.msra.mxu0 %v1348
        %1357 = vmatprep.subr.mxu0 0.0
        %1358 = vmatpush1.msra.mxu0 %v1347
        %1359 = vmatprep.subr.mxu0 0.0
        %1360 = vmatpush1.msra.mxu0 %v1346
        %1361 = vmatprep.subr.mxu0 0.0
        %1362 = vmatpush1.msra.mxu0 %v1345
        %1363 = vmatprep.subr.mxu0 0.0
        %1364 = vmatpush1.msra.mxu0 %v1344
        %1365 = vmatprep.subr.mxu0 0.0
        %1366 = vmatpush1.msra.mxu0 %v1343
        %1367 = vmatprep.subr.mxu0 0.0
        %1368 = vmatpush1.msra.mxu0 %v1342
        %1369 = vmatprep.subr.mxu0 0.0
        %1370 = vmatpush1.msra.mxu0 %v1341
        %1371 = vmatprep.subr.mxu0 0.0
        %1372 = vmatpush1.msra.mxu0 %v1340
        %1373 = vmatprep.subr.mxu0 0.0
        %1374 = vmatpush1.msra.mxu0 %v1339
        %1375 = vmatprep.subr.mxu0 0.0
        %1376 = vmatpush1.msra.mxu0 %v1338
        %1377 = vmatprep.subr.mxu0 0.0
        %1378 = vmatpush1.msra.mxu0 %v1337
        %1379 = vmatprep.subr.mxu0 0.0
        %1380 = vmatpush1.msra.mxu0 %v1336
        %1381 = vmatprep.subr.mxu0 0.0
        %1382 = vmatpush1.msra.mxu0 %v1335
        %1383 = vmatprep.subr.mxu0 0.0
        %1384 = vmatpush2.msra.mxu0 0.0
        %1385 = vmatprep.subr.mxu0 0.0
        %1386 = vmatpush2.msra.mxu0 0.0
        %1387 = vmatprep.subr.mxu0 0.0
        %1388 = vmatpush2.msra.mxu0 0.0
        %1389 = vmatprep.subr.mxu0 0.0
        %1390 = vmatpush2.msra.mxu0 0.0
        %1391 = vmatprep.subr.mxu0 0.0
        %1392 = vmatpush2.msra.mxu0 0.0
        %1393 = vmatprep.subr.mxu0 0.0
        %1394 = vmatpush2.msra.mxu0 0.0
        %1395 = vmatprep.subr.mxu0 0.0
        %1396 = vmatpush2.msra.mxu0 0.0
        %1397 = vmatprep.subr.mxu0 0.0
        %1398 = vmatpush2.msra.mxu0 0.0
        %1399 = vmatprep.subr.mxu0 0.0
        %1400 = vmatpush2.msra.mxu0 0.0
        %1401 = vmatprep.subr.mxu0 0.0
        %1402 = vmatpush2.msra.mxu0 0.0
        %1403 = vmatprep.subr.mxu0 0.0
        %1404 = vmatpush2.msra.mxu0 0.0
        %1405 = vmatprep.subr.mxu0 0.0
        %1406 = vmatpush2.msra.mxu0 0.0
        %1407 = vmatprep.subr.mxu0 0.0
        %1408 = vmatpush2.msra.mxu0 0.0
        %1409 = vmatprep.subr.mxu0 0.0
        %1410 = vmatpush2.msra.mxu0 0.0
        %1411 = vmatprep.subr.mxu0 0.0
        %1412 = vmatpush2.msra.mxu0 0.0
        %1413 = vmatprep.subr.mxu0 0.0
        %1414 = vmatpush2.msra.mxu0 0.0
        %1415 = vmatprep.mubr.f32.mxu0 0.0
        %1416 = vmatmul.mubr.f32.gmra.mxu0 %v1334
        %v1417 = vpop.f32.mrf.mxu0
        %v1418 = vadd.f32 0.0, %v1417
        %v1419 = vpop.f32.mrf.mxu0
        %1420 = vdwg.mxu0
        %1421 = vmatprep.subr.mxu0 0.0
        %1422 = vmatpush1.msra.mxu0 %v1333
        %1423 = vmatprep.subr.mxu0 0.0
        %1424 = vmatpush1.msra.mxu0 %v1332
        %1425 = vmatprep.subr.mxu0 0.0
        %1426 = vmatpush1.msra.mxu0 %v1331
        %1427 = vmatprep.subr.mxu0 0.0
        %1428 = vmatpush1.msra.mxu0 %v1330
        %1429 = vmatprep.subr.mxu0 0.0
        %1430 = vmatpush1.msra.mxu0 %v1329
        %1431 = vmatprep.subr.mxu0 0.0
        %1432 = vmatpush1.msra.mxu0 %v1328
        %1433 = vmatprep.subr.mxu0 0.0
        %1434 = vmatpush1.msra.mxu0 %v1327
        %1435 = vmatprep.subr.mxu0 0.0
        %1436 = vmatpush1.msra.mxu0 %v1326
        %1437 = vmatprep.subr.mxu0 0.0
        %1438 = vmatpush1.msra.mxu0 %v1325
        %1439 = vmatprep.subr.mxu0 0.0
        %1440 = vmatpush1.msra.mxu0 %v1324
        %1441 = vmatprep.subr.mxu0 0.0
        %1442 = vmatpush1.msra.mxu0 %v1323
        %1443 = vmatprep.subr.mxu0 0.0
        %1444 = vmatpush1.msra.mxu0 %v1322
        %1445 = vmatprep.subr.mxu0 0.0
        %1446 = vmatpush1.msra.mxu0 %v1321
        %1447 = vmatprep.subr.mxu0 0.0
        %1448 = vmatpush1.msra.mxu0 %v1320
        %1449 = vmatprep.subr.mxu0 0.0
        %1450 = vmatpush1.msra.mxu0 %v1319
        %1451 = vmatprep.subr.mxu0 0.0
        %1452 = vmatpush1.msra.mxu0 %v1318
        %1453 = vmatprep.subr.mxu0 0.0
        %1454 = vmatpush2.msra.mxu0 0.0
        %1455 = vmatprep.subr.mxu0 0.0
        %1456 = vmatpush2.msra.mxu0 0.0
        %1457 = vmatprep.subr.mxu0 0.0
        %1458 = vmatpush2.msra.mxu0 0.0
        %1459 = vmatprep.subr.mxu0 0.0
        %1460 = vmatpush2.msra.mxu0 0.0
        %1461 = vmatprep.subr.mxu0 0.0
        %1462 = vmatpush2.msra.mxu0 0.0
        %1463 = vmatprep.subr.mxu0 0.0
        %1464 = vmatpush2.msra.mxu0 0.0
        %1465 = vmatprep.subr.mxu0 0.0
        %1466 = vmatpush2.msra.mxu0 0.0
        %1467 = vmatprep.subr.mxu0 0.0
        %1468 = vmatpush2.msra.mxu0 0.0
        %1469 = vmatprep.subr.mxu0 0.0
        %1470 = vmatpush2.msra.mxu0 0.0
        %1471 = vmatprep.subr.mxu0 0.0
        %1472 = vmatpush2.msra.mxu0 0.0
        %1473 = vmatprep.subr.mxu0 0.0
        %1474 = vmatpush2.msra.mxu0 0.0
        %1475 = vmatprep.subr.mxu0 0.0
        %1476 = vmatpush2.msra.mxu0 0.0
        %1477 = vmatprep.subr.mxu0 0.0
        %1478 = vmatpush2.msra.mxu0 0.0
        %1479 = vmatprep.subr.mxu0 0.0
        %1480 = vmatpush2.msra.mxu0 0.0
        %1481 = vmatprep.subr.mxu0 0.0
        %1482 = vmatpush2.msra.mxu0 0.0
        %1483 = vmatprep.subr.mxu0 0.0
        %1484 = vmatpush2.msra.mxu0 0.0
        %1485 = vmatprep.mubr.f32.mxu0 0.0
        %1486 = vmatmul.mubr.f32.gmra.mxu0 %v1315
        %v1487 = vpop.f32.mrf.mxu0
        %v1488 = vadd.f32 %v1418, %v1487
        %v1489 = vpop.f32.mrf.mxu0
        %1490 = vdwg.mxu0
        %v1491 = vtanh.pop %v1488
        %1492 = vst [vmem:[%s514] sm:$0xff] %v1491
        %s1493 = sand.u32 %s253, 1
        %s1494 = scalar_lea.sflag [#allocation4], %s1493
        %s1495 = sand.u32 %s253, 1
        %s1496 = smul.addr %s1495, 8
        %s1497 = scalar_lea.vmem [#allocation11], %s1496
        %s1498 = sand.u32 %s279, 1
        %s1499 = scalar_lea.sflag [#allocation13], %s1498
        %s1500 = sand.u32 %s279, 1
        %s1501 = smul.addr %s1500, 8
        %s1502 = scalar_lea.vmem [#allocation12], %s1501
        %p1503 = scmp.lt.s32.totalorder %s36, 1
        %s1504 = scalar_select %p1503, %s36, 1
        %s1505 = smul.addr %s1504, 8
        %s1506 = scalar_lea.vmem %s11, %s1505
        // Predicated region
        $region77: #{tpu_custom_call.1} parent=55 // pred_check
          %p1507 = pneg %p263
        $region78: #{tpu_custom_call.1} parent=55 // pred_check_branch
          %1509 = sbr.rel (%p1507) target = $region80
        $region79: #{tpu_custom_call.1} parent=55 // pred_region
          %s1511 = ssub.s32 128, 128
          %1512 = vsyncadd %s1494, %s1511
          %s1513 = smul.addr %s36, 128
          %s1514 = scalar_lea.hbm %s9, %s1513
          %s1516 = sshll.u32 %s1497, 4
          %s1517 = int_to_ptr.vmem [resolvable:$true] %s1516
          %1519 = dma.vmem_to_hbm [thread:$0]  %s1517, 128, %s1514, %s1494
        $region80: #{tpu_custom_call.1} parent=55 // pred_fallthru
          _
        // Predicated region
        $region81: #{tpu_custom_call.1} parent=55 // pred_check
          %p1520 = pneg %p289
        $region82: #{tpu_custom_call.1} parent=55 // pred_check_branch
          %1522 = sbr.rel (%p1520) target = $region84
        $region83: #{tpu_custom_call.1} parent=55 // pred_region
          %s1524 = ssub.s32 128, 128
          %1525 = vsyncadd %s1499, %s1524
          %s1526 = smul.addr %s36, 128
          %s1527 = scalar_lea.hbm %s10, %s1526
          %s1529 = sshll.u32 %s1502, 4
          %s1530 = int_to_ptr.vmem [resolvable:$true] %s1529
          %1532 = dma.vmem_to_hbm [thread:$0]  %s1530, 128, %s1527, %s1499
        $region84: #{tpu_custom_call.1} parent=55 // pred_fallthru
          _
        // Predicated region
        $region85: #{tpu_custom_call.1} parent=55 // pred_check
          %p1533 = pneg %p315
        $region86: #{tpu_custom_call.1} parent=55 // pred_check_branch
          %1535 = sbr.rel (%p1533) target = $region88
        $region87: #{tpu_custom_call.1} parent=55 // pred_region
          _
        $region88: #{tpu_custom_call.1} parent=55 // pred_fallthru
          _
      $region56: #{tpu_custom_call.1} parent=5 // pred_fallthru
        _
      %p1536 = scmp.le.s32.totalorder 2, %s31
      // Predicated region
      $region89: #{tpu_custom_call.1} parent=5 // pred_check
        %p1537 = pneg %p1536
      $region90: #{tpu_custom_call.1} parent=5 // pred_check_branch
        %1539 = sbr.rel (%p1537) target = $region92
      $region91: #{tpu_custom_call.1} parent=5 // pred_region
        %s1540 = ssub.s32 %s31, 2
        // Predicated region
        $region93: #{tpu_custom_call.1} parent=91 // pred_check
          %p1541 = pneg %p269
        $region94: #{tpu_custom_call.1} parent=91 // pred_check_branch
          %1543 = sbr.rel (%p1541) target = $region96
        $region95: #{tpu_custom_call.1} parent=91 // pred_region
          %s1544 = sand.u32 %s254, 1
          %s1545 = scalar_lea.sflag [#allocation4], %s1544
          %s1546 = sand.u32 %s254, 1
          %s1547 = smul.addr %s1546, 8
          %s1548 = scalar_lea.vmem [#allocation11], %s1547
          %1549 = dma.done %s1545, 128
        $region96: #{tpu_custom_call.1} parent=91 // pred_fallthru
          _
        // Predicated region
        $region97: #{tpu_custom_call.1} parent=91 // pred_check
          %p1550 = pneg %p295
        $region98: #{tpu_custom_call.1} parent=91 // pred_check_branch
          %1552 = sbr.rel (%p1550) target = $region100
        $region99: #{tpu_custom_call.1} parent=91 // pred_region
          %s1553 = sand.u32 %s280, 1
          %s1554 = scalar_lea.sflag [#allocation13], %s1553
          %s1555 = sand.u32 %s280, 1
          %s1556 = smul.addr %s1555, 8
          %s1557 = scalar_lea.vmem [#allocation12], %s1556
          %1558 = dma.done %s1554, 128
        $region100: #{tpu_custom_call.1} parent=91 // pred_fallthru
          _
        // Predicated region
        $region101: #{tpu_custom_call.1} parent=91 // pred_check
          %p1559 = pneg %p321
        $region102: #{tpu_custom_call.1} parent=91 // pred_check_branch
          %1561 = sbr.rel (%p1559) target = $region104
        $region103: #{tpu_custom_call.1} parent=91 // pred_region
          %p1562 = scmp.lt.s32.totalorder %s37, 1
          %s1563 = scalar_select %p1562, %s37, 1
          %s1564 = smul.addr %s1563, 8
          %s1565 = scalar_lea.vmem %s11, %s1564
        $region104: #{tpu_custom_call.1} parent=91 // pred_fallthru
          _
      $region92: #{tpu_custom_call.1} parent=5 // pred_fallthru
        _
    $region6: #{tpu_custom_call.1} parent=1 // loop_footer
      %s35 = sadd.s32 1, %s31
    $region7: #{tpu_custom_call.1} parent=1 // loop_footer_branch
      %30 = sbr.rel target = $region3
    $region8: #{tpu_custom_call.1} parent=1 // loop_exit
      _
    %1566 = vsyncpa [#allocation3], 1
    %s1567 = scalar_lea.sflag [#allocation3], 1
    %1568 = vsyncpa %s1567, 1
    %1569 = vsyncpa [#allocation6], 1
    %s1570 = scalar_lea.sflag [#allocation6], 1
    %1571 = vsyncpa %s1570, 1
    %1572 = vsyncpa [#allocation9], 1
    %1573 = vsyncpa [#allocation4], 1
    %s1574 = scalar_lea.sflag [#allocation4], 1
    %1575 = vsyncpa %s1574, 1
    %1576 = vsyncpa [#allocation13], 1
    %s1577 = scalar_lea.sflag [#allocation13], 1
    %1578 = vsyncpa %s1577, 1

</llo_original>
